<compile_context>
chip_gen: v7x
topology: tpu7x:2x2x1
jax: 0.10.0
libtpu: 0.0.40
codegen_flags: <defaults>
</compile_context>

<pallas_src>
import jax
import jax.numpy as jnp
from jax.experimental import pallas as pl
from jax.experimental.pallas import tpu as pltpu

_LANES = 128


def _round_up(x: int, m: int) -> int:
    return ((x + m - 1) // m) * m


def big_ext_arch_kernel(x_ref, w1_ref, b1_ref, w2_ref, b2_ref, wd_ref, bd_ref,
                        out_ref):
    """Fused MLP head for one batch tile: 2 bf16 matmuls + f32 difference
    projection + closed-form 2-class log-softmax, all operands in VMEM."""
    # Input arrives in f32; cast to bf16 on the VPU (hidden under the MXU)
    # instead of materializing a bf16 copy in HBM in the wrapper.
    x = x_ref[...].astype(jnp.bfloat16)

    # fc1 + ReLU   (dropout p=0.1 is identity in eval mode)
    h1 = jnp.dot(x, w1_ref[...], preferred_element_type=jnp.float32)
    h1 = jnp.maximum(h1 + b1_ref[...], 0.0).astype(jnp.bfloat16)

    # fc2 + ReLU
    h2 = jnp.dot(h1, w2_ref[...], preferred_element_type=jnp.float32)
    h2 = jnp.maximum(h2 + b2_ref[...], 0.0)          # stays f32 into fc3

    # fc3 collapsed to a difference projection: for 2-class log-softmax only
    # d = logits[:,1] - logits[:,0] matters.  wd/bd are lane-broadcast to 128
    # lanes so the MXU output, the softplus and the store are all lane-dense.
    d = jnp.dot(h2, wd_ref[...], preferred_element_type=jnp.float32) + bd_ref[...]

    # LogSoftmax(dim=1), closed form:
    #   out0 = -softplus(d), out1 = d - softplus(d)
    # softplus computed stably: max(d,0) + log(1 + exp(-|d|))   (EUP ops)
    sp = jnp.maximum(d, 0.0) + jnp.log(1.0 + jnp.exp(-jnp.abs(d)))
    lane = jax.lax.broadcasted_iota(jnp.int32, d.shape, 1)
    out = jnp.where(lane == 0, -sp, jnp.where(lane == 1, d - sp, 0.0))
    out_ref[...] = out.astype(out_ref.dtype)


def big_ext_arch_forward(cls_hs, params, *, tm=512):
    """Batch-tiled pallas_call.  Weights stay VMEM-resident across grid steps;
    the batch axis is marked parallel for megacore (v7x) sharding."""
    w1, b1, w2, b2, w3, b3 = params
    B, H = cls_hs.shape
    n_classes = w3.shape[1]
    assert n_classes == 2, "closed-form log-softmax assumes 2 classes"

    # fc3 difference projection (f32, tiny), lane-broadcast to 128 lanes.
    w3f = w3.astype(jnp.float32)
    b3f = b3.astype(jnp.float32).reshape(-1)
    wd = (w3f[:, 1] - w3f[:, 0]).reshape(-1, 1)                 # (256, 1)
    wd_pad = jnp.tile(wd, (1, _LANES))                          # (256, 128)
    bd_pad = jnp.full((1, _LANES), b3f[1] - b3f[0], jnp.float32)

    # Batch tiling: bf16 packs 2 rows per sublane -> 16-row granularity.
    b16 = _round_up(B, 16)
    tm_eff = min(tm, b16)
    # Megacore-aware: give the 1-D parallel grid >= 2 steps when possible so
    # both v7x TensorCores get work (harmless extra step on v5e/v6e).
    if b16 >= 32:
        tm_eff = min(tm_eff, _round_up((b16 + 1) // 2, 16))
    b_pad = _round_up(B, tm_eff)

    x = cls_hs                                   # f32 straight into the kernel
    if b_pad != B:
        x = jnp.pad(x, ((0, b_pad - B), (0, 0)))

    grid = (b_pad // tm_eff,)

    # NOTE: weight/bias blocks could be single-buffered (pipeline_mode) since
    # their block index is constant, saving ~1 MiB VMEM; left at the default
    # as the footprint is already far below the scoped VMEM limit.
    out = pl.pallas_call(
        big_ext_arch_kernel,
        out_shape=jax.ShapeDtypeStruct((b_pad, _LANES), jnp.float32),
        grid=grid,
        in_specs=[
            pl.BlockSpec((tm_eff, H), lambda i: (i, 0)),        # x tile (pipelined)
            pl.BlockSpec(w1.shape, lambda i: (0, 0)),           # weights resident
            pl.BlockSpec(b1.shape, lambda i: (0, 0)),
            pl.BlockSpec(w2.shape, lambda i: (0, 0)),
            pl.BlockSpec(b2.shape, lambda i: (0, 0)),
            pl.BlockSpec(wd_pad.shape, lambda i: (0, 0)),
            pl.BlockSpec(bd_pad.shape, lambda i: (0, 0)),
        ],
        out_specs=pl.BlockSpec((tm_eff, _LANES), lambda i: (i, 0)),
        compiler_params=pltpu.CompilerParams(
            dimension_semantics=("parallel",)),
    )(x, w1, b1, w2, b2, wd_pad, bd_pad)

    # TODO(synk): for repeated tiny-batch online inference, keep the ~1 MiB of
    # bf16 weights resident across calls (cross-pallas_call prefetch, P10) or
    # fuse this head into the kernel that produces cls_hs.
    return out[:B, :n_classes]


def init_params(key, input_size=768, h1=512, h2=256, n_classes=2):
    """Deterministic synthetic parameters (shapes from Big_Ext_Arch.__init__).
    fc1/fc2 weights in bf16 (MXU-native), biases f32; fc3 kept in f32."""
    k1, k2, k3, k4, k5, k6 = jax.random.split(key, 6)
    w1 = (jax.random.normal(k1, (input_size, h1), jnp.float32) * 0.02).astype(jnp.bfloat16)
    b1 = jax.random.normal(k2, (1, h1), jnp.float32) * 0.02
    w2 = (jax.random.normal(k3, (h1, h2), jnp.float32) * 0.02).astype(jnp.bfloat16)
    b2 = jax.random.normal(k4, (1, h2), jnp.float32) * 0.02
    w3 = jax.random.normal(k5, (h2, n_classes), jnp.float32) * 0.02
    b3 = jax.random.normal(k6, (1, n_classes), jnp.float32) * 0.02
    return (w1, b1, w2, b2, w3, b3)


def reference_forward(cls_hs, params):
    """Pure-JAX reference replicating the kernel's bf16-fc1/fc2, f32-fc3 path.
    NOTE: bf16 fc1/fc2 means outputs deviate from a pure-f32 PyTorch head by
    more than 1e-4; tolerance here validates kernel vs. this dtype path."""
    w1, b1, w2, b2, w3, b3 = params
    x = cls_hs.astype(jnp.bfloat16)
    h1 = jnp.maximum(jnp.dot(x, w1, preferred_element_type=jnp.float32) + b1, 0.0)
    h1 = h1.astype(jnp.bfloat16)
    h2 = jnp.maximum(jnp.dot(h1, w2, preferred_element_type=jnp.float32) + b2, 0.0)
    logits = jnp.dot(h2, w3, preferred_element_type=jnp.float32) + b3
    return jax.nn.log_softmax(logits, axis=1)


if __name__ == "__main__":
    key = jax.random.PRNGKey(0)
    k_x, k_x2, k_p = jax.random.split(key, 3)

    INPUT_SIZE = 768
    params = init_params(k_p, input_size=INPUT_SIZE)

    # cls_hs stands in for the pooled CLS output of `self.pretrained_model`.
    # TODO(synk): the pretrained transformer encoder itself is out of scope;
    # its pooled CLS output is provided directly as the kernel input.

    # Small online-inference batch (B=2): single grid step, padded to 16 rows.
    B1 = 2
    cls_hs1 = jax.random.normal(k_x, (B1, INPUT_SIZE), jnp.float32)
    out1 = jax.block_until_ready(big_ext_arch_forward(cls_hs1, params))
    ref1 = reference_forward(cls_hs1, params)
    assert out1.shape == (B1, 2)
    assert jnp.allclose(out1, ref1, atol=2e-4, rtol=2e-4), "mismatch vs reference (B=2)"

    # Mid-size batch (B=40): exercises padding + the 2-step megacore-aware grid.
    B2 = 40
    cls_hs2 = jax.random.normal(k_x2, (B2, INPUT_SIZE), jnp.float32)
    out2 = jax.block_until_ready(big_ext_arch_forward(cls_hs2, params))
    ref2 = reference_forward(cls_hs2, params)
    assert out2.shape == (B2, 2)
    assert jnp.allclose(out2, ref2, atol=2e-4, rtol=2e-4), "mismatch vs reference (B=40)"

    print("KERNEL_OK")
</pallas_src>

<mosaic_0001>
module attributes {stable_mosaic.version = 11 : i64} {
  func.func @big_ext_arch_kernel(%arg0: i32, %arg1: memref<16x768xf32, #tpu.memory_space<vmem>>, %arg2: memref<768x512xbf16, #tpu.memory_space<vmem>>, %arg3: memref<1x512xf32, #tpu.memory_space<vmem>>, %arg4: memref<512x256xbf16, #tpu.memory_space<vmem>>, %arg5: memref<1x256xf32, #tpu.memory_space<vmem>>, %arg6: memref<256x128xf32, #tpu.memory_space<vmem>>, %arg7: memref<1x128xf32, #tpu.memory_space<vmem>>, %arg8: memref<16x128xf32, #tpu.memory_space<vmem>>) attributes {dimension_semantics = [#tpu.dimension_semantics<parallel>], iteration_bounds = array<i64: 1>, scalar_prefetch = 0 : i64, scratch_operands = 0 : i64, tpu.core_type = #tpu.core_type<tc>, window_params = [{transform_indices = @transform_0, window_bounds = array<i64: 16, 768>}, {pipeline_mode = #tpu.pipeline_mode<synchronous>, transform_indices = @transform_1, window_bounds = array<i64: 768, 512>}, {pipeline_mode = #tpu.pipeline_mode<synchronous>, transform_indices = @transform_2, window_bounds = array<i64: 1, 512>}, {pipeline_mode = #tpu.pipeline_mode<synchronous>, transform_indices = @transform_3, window_bounds = array<i64: 512, 256>}, {pipeline_mode = #tpu.pipeline_mode<synchronous>, transform_indices = @transform_4, window_bounds = array<i64: 1, 256>}, {pipeline_mode = #tpu.pipeline_mode<synchronous>, transform_indices = @transform_5, window_bounds = array<i64: 256, 128>}, {pipeline_mode = #tpu.pipeline_mode<synchronous>, transform_indices = @transform_6, window_bounds = array<i64: 1, 128>}, {transform_indices = @transform_7, window_bounds = array<i64: 16, 128>}]} {
    %c0 = arith.constant 0 : index
    %c0_0 = arith.constant 0 : index
    %0 = vector.load %arg1[%c0, %c0_0] : memref<16x768xf32, #tpu.memory_space<vmem>>, vector<16x768xf32>
    %1 = arith.truncf %0 : vector<16x768xf32> to vector<16x768xbf16>
    %c0_1 = arith.constant 0 : index
    %c0_2 = arith.constant 0 : index
    %2 = vector.load %arg2[%c0_1, %c0_2] : memref<768x512xbf16, #tpu.memory_space<vmem>>, vector<768x512xbf16>
    %cst = arith.constant dense<0.000000e+00> : vector<16x512xf32>
    %3 = tpu.matmul %1, %2, %cst {dimension_numbers = #tpu.dot_dimension_numbers<[1], [0], [0], [1], [0, 0, 1, 1], [], []>} : vector<16x768xbf16>, vector<768x512xbf16>, vector<16x512xf32> -> vector<16x512xf32>
    %c0_3 = arith.constant 0 : index
    %c0_4 = arith.constant 0 : index
    %4 = vector.load %arg3[%c0_3, %c0_4] : memref<1x512xf32, #tpu.memory_space<vmem>>, vector<1x512xf32>
    %5 = vector.broadcast %4 : vector<1x512xf32> to vector<16x512xf32>
    %6 = arith.addf %3, %5 : vector<16x512xf32>
    %cst_5 = arith.constant 0.000000e+00 : f32
    %7 = vector.broadcast %cst_5 : f32 to vector<16x512xf32>
    %8 = arith.maximumf %6, %7 : vector<16x512xf32>
    %9 = arith.truncf %8 : vector<16x512xf32> to vector<16x512xbf16>
    %c0_6 = arith.constant 0 : index
    %c0_7 = arith.constant 0 : index
    %10 = vector.load %arg4[%c0_6, %c0_7] : memref<512x256xbf16, #tpu.memory_space<vmem>>, vector<512x256xbf16>
    %cst_8 = arith.constant dense<0.000000e+00> : vector<16x256xf32>
    %11 = tpu.matmul %9, %10, %cst_8 {dimension_numbers = #tpu.dot_dimension_numbers<[1], [0], [0], [1], [0, 0, 1, 1], [], []>} : vector<16x512xbf16>, vector<512x256xbf16>, vector<16x256xf32> -> vector<16x256xf32>
    %c0_9 = arith.constant 0 : index
    %c0_10 = arith.constant 0 : index
    %12 = vector.load %arg5[%c0_9, %c0_10] : memref<1x256xf32, #tpu.memory_space<vmem>>, vector<1x256xf32>
    %13 = vector.broadcast %12 : vector<1x256xf32> to vector<16x256xf32>
    %14 = arith.addf %11, %13 : vector<16x256xf32>
    %cst_11 = arith.constant 0.000000e+00 : f32
    %15 = vector.broadcast %cst_11 : f32 to vector<16x256xf32>
    %16 = arith.maximumf %14, %15 : vector<16x256xf32>
    %c0_12 = arith.constant 0 : index
    %c0_13 = arith.constant 0 : index
    %17 = vector.load %arg6[%c0_12, %c0_13] : memref<256x128xf32, #tpu.memory_space<vmem>>, vector<256x128xf32>
    %cst_14 = arith.constant dense<0.000000e+00> : vector<16x128xf32>
    %18 = tpu.matmul %16, %17, %cst_14 {dimension_numbers = #tpu.dot_dimension_numbers<[1], [0], [0], [1], [0, 0, 1, 1], [], []>} : vector<16x256xf32>, vector<256x128xf32>, vector<16x128xf32> -> vector<16x128xf32>
    %c0_15 = arith.constant 0 : index
    %c0_16 = arith.constant 0 : index
    %19 = vector.load %arg7[%c0_15, %c0_16] : memref<1x128xf32, #tpu.memory_space<vmem>>, vector<1x128xf32>
    %20 = vector.broadcast %19 : vector<1x128xf32> to vector<16x128xf32>
    %21 = arith.addf %18, %20 : vector<16x128xf32>
    %cst_17 = arith.constant 0.000000e+00 : f32
    %22 = vector.broadcast %cst_17 : f32 to vector<16x128xf32>
    %23 = arith.maximumf %21, %22 : vector<16x128xf32>
    %24 = math.absf %21 : vector<16x128xf32>
    %cst_18 = arith.constant 0.000000e+00 : f32
    %25 = vector.broadcast %cst_18 : f32 to vector<16x128xf32>
    %26 = arith.subf %25, %24 : vector<16x128xf32>
    %27 = math.exp %26 : vector<16x128xf32>
    %cst_19 = arith.constant 1.000000e+00 : f32
    %28 = vector.broadcast %cst_19 : f32 to vector<16x128xf32>
    %29 = arith.addf %28, %27 : vector<16x128xf32>
    %30 = math.log %29 : vector<16x128xf32>
    %31 = arith.addf %23, %30 : vector<16x128xf32>
    %32 = tpu.iota {dimensions = array<i32: 1>} : vector<16x128xi32>
    %c0_i32 = arith.constant 0 : i32
    %33 = vector.broadcast %c0_i32 : i32 to vector<16x128xi32>
    %34 = arith.cmpi eq, %32, %33 : vector<16x128xi32>
    %cst_20 = arith.constant 0.000000e+00 : f32
    %35 = vector.broadcast %cst_20 : f32 to vector<16x128xf32>
    %36 = arith.subf %35, %31 : vector<16x128xf32>
    %c1_i32 = arith.constant 1 : i32
    %37 = vector.broadcast %c1_i32 : i32 to vector<16x128xi32>
    %38 = arith.cmpi eq, %32, %37 : vector<16x128xi32>
    %39 = arith.subf %21, %31 : vector<16x128xf32>
    %cst_21 = arith.constant 0.000000e+00 : f32
    %40 = vector.broadcast %cst_21 : f32 to vector<16x128xf32>
    %41 = arith.select %38, %39, %40 : vector<16x128xi1>, vector<16x128xf32>
    %42 = arith.select %34, %36, %41 : vector<16x128xi1>, vector<16x128xf32>
    %c0_22 = arith.constant 0 : index
    %c0_23 = arith.constant 0 : index
    %43 = vector.load %arg8[%c0_22, %c0_23] : memref<16x128xf32, #tpu.memory_space<vmem>>, vector<16x128xf32>
    tpu.vector_store %arg8[%c0_22, %c0_23], %42 {strides = array<i32>} : memref<16x128xf32, #tpu.memory_space<vmem>>, vector<16x128xf32>,
    return
  }
  func.func @transform_0(%arg0: i32) -> (i32, i32) {
    %c0_i32 = arith.constant 0 : i32
    %c0_i32_0 = arith.constant 0 : i32
    return %arg0, %c0_i32 : i32, i32
  }
  func.func @transform_1(%arg0: i32) -> (i32, i32) {
    %c0_i32 = arith.constant 0 : i32
    %c0_i32_0 = arith.constant 0 : i32
    %c0_i32_1 = arith.constant 0 : i32
    return %c0_i32, %c0_i32_0 : i32, i32
  }
  func.func @transform_2(%arg0: i32) -> (i32, i32) {
    %c0_i32 = arith.constant 0 : i32
    %c0_i32_0 = arith.constant 0 : i32
    %c0_i32_1 = arith.constant 0 : i32
    return %c0_i32, %c0_i32_0 : i32, i32
  }
  func.func @transform_3(%arg0: i32) -> (i32, i32) {
    %c0_i32 = arith.constant 0 : i32
    %c0_i32_0 = arith.constant 0 : i32
    %c0_i32_1 = arith.constant 0 : i32
    return %c0_i32, %c0_i32_0 : i32, i32
  }
  func.func @transform_4(%arg0: i32) -> (i32, i32) {
    %c0_i32 = arith.constant 0 : i32
    %c0_i32_0 = arith.constant 0 : i32
    %c0_i32_1 = arith.constant 0 : i32
    return %c0_i32, %c0_i32_0 : i32, i32
  }
  func.func @transform_5(%arg0: i32) -> (i32, i32) {
    %c0_i32 = arith.constant 0 : i32
    %c0_i32_0 = arith.constant 0 : i32
    %c0_i32_1 = arith.constant 0 : i32
    return %c0_i32, %c0_i32_0 : i32, i32
  }
  func.func @transform_6(%arg0: i32) -> (i32, i32) {
    %c0_i32 = arith.constant 0 : i32
    %c0_i32_0 = arith.constant 0 : i32
    %c0_i32_1 = arith.constant 0 : i32
    return %c0_i32, %c0_i32_0 : i32, i32
  }
  func.func @transform_7(%arg0: i32) -> (i32, i32) {
    %c0_i32 = arith.constant 0 : i32
    %c0_i32_0 = arith.constant 0 : i32
    return %arg0, %c0_i32 : i32, i32
  }
}

</mosaic_0001>

<llo_original>
// kernel: tpu_custom_call.1
$region0: #{tpu_custom_call.1}
  #allocation0 [shape = 'u32[]', space=smem, size = 0x4, offset = 0x4, fixed_abs, tag = 'smem constant byte address 0x4 - core index']
  #allocation1 [shape = 'u32[144,128]{1,0:T(1,128)}', space=vmem, size = 0x12000, scoped, tag = 'internal scratch']
  %s0 = inlined_call_operand.hbm [shape: f32[16,768], index: 0, kind: input, shape index: {}]
  %s1 = inlined_call_operand.hbm [shape: bf16[768,512], index: 1, kind: input, shape index: {}]
  %s2 = inlined_call_operand.vmem [shape: f32[1,512], index: 2, kind: input, shape index: {}]
  %s3 = inlined_call_operand.hbm [shape: bf16[512,256], index: 3, kind: input, shape index: {}]
  %s4 = inlined_call_operand.vmem [shape: f32[1,256], index: 4, kind: input, shape index: {}]
  %s5 = inlined_call_operand.hbm [shape: f32[256,128], index: 5, kind: input, shape index: {}]
  %s6 = inlined_call_operand.vmem [shape: f32[1,128], index: 6, kind: input, shape index: {}]
  %s7 = inlined_call_operand.hbm [shape: f32[16,128], index: 7, kind: output, shape index: {}]
  %s8 = sld [smem:[#allocation0]]
  $region54: #{tpu_custom_call.1} parent=0
    _
  %s10 = ssub.s32 1, %s8
  %s11 = scalar_select 0, %s10, %s8
  $region1: #{tpu_custom_call.1} parent=0
    #allocation2 [shape = 'u8[49152]{0}', space=vmem, size = 0xc000, scoped, tag = 'input window, operand 0, single buffered']
    #allocation3 [shape = 's32[1]{0}', space=sflag, size = 0x4, scoped, tag = 'scoped memory for tpu_custom_call.1']
    #allocation4 [shape = 's32[1]{0}', space=sflag, size = 0x4, scoped, tag = 'scoped memory for tpu_custom_call.1']
    #allocation5 [shape = 'u8[786432]{0}', space=vmem, size = 0xc0000, scoped, tag = 'input window, operand 1, single buffered']
    #allocation6 [shape = 's32[1]{0}', space=sflag, size = 0x4, scoped, tag = 'scoped memory for tpu_custom_call.1']
    #allocation7 [shape = 'u8[262144]{0}', space=vmem, size = 0x40000, scoped, tag = 'input window, operand 3, single buffered']
    #allocation8 [shape = 'u8[131072]{0}', space=vmem, size = 0x20000, scoped, tag = 'input window, operand 5, single buffered']
    #allocation9 [shape = 's32[1]{0}', space=sflag, size = 0x4, scoped, tag = 'scoped memory for tpu_custom_call.1']
    #allocation10 [shape = 'u8[8192]{0}', space=vmem, size = 0x2000, scoped, tag = 'output window, operand 0, single buffered']
    %12 = vsyncpa [#allocation3], 0
    %13 = vsyncpa [#allocation6], 0
    %14 = vsyncpa [#allocation9], 0
    %15 = vsyncpa [#allocation4], 0
    // Predicated region
    $region2: #{tpu_custom_call.1} parent=1 // pred_check
      _
    $region3: #{tpu_custom_call.1} parent=1 // pred_check_branch
      %17 = sbr.rel (0) target = $region5
    $region4: #{tpu_custom_call.1} parent=1 // pred_region
      %s19 = ssub.s32 1536, 1536
      %20 = vsyncadd [#allocation3], %s19
      %s21 = sshll.u32 [#allocation2], 4
      %s22 = int_to_ptr.vmem [resolvable:$true] %s21
      %27 = dma.hbm_to_vmem [thread:$0]  %s0, 1536, %s22, [#allocation3], 768, 768, 48
    $region5: #{tpu_custom_call.1} parent=1 // pred_fallthru
      _
    // Predicated region
    $region6: #{tpu_custom_call.1} parent=1 // pred_check
      _
    $region7: #{tpu_custom_call.1} parent=1 // pred_check_branch
      %29 = sbr.rel (0) target = $region9
    $region8: #{tpu_custom_call.1} parent=1 // pred_region
      %s31 = ssub.s32 24576, 24576
      %32 = vsyncadd [#allocation6], %s31
      %s33 = sshll.u32 [#allocation5], 4
      %s34 = int_to_ptr.vmem [resolvable:$true] %s33
      %39 = dma.hbm_to_vmem [thread:$0]  %s1, 24576, %s34, [#allocation6], 256, 256, 16
    $region9: #{tpu_custom_call.1} parent=1 // pred_fallthru
      _
    // Predicated region
    $region10: #{tpu_custom_call.1} parent=1 // pred_check
      _
    $region11: #{tpu_custom_call.1} parent=1 // pred_check_branch
      %41 = sbr.rel (0) target = $region13
    $region12: #{tpu_custom_call.1} parent=1 // pred_region
      _
    $region13: #{tpu_custom_call.1} parent=1 // pred_fallthru
      _
    // Predicated region
    $region14: #{tpu_custom_call.1} parent=1 // pred_check
      _
    $region15: #{tpu_custom_call.1} parent=1 // pred_check_branch
      %43 = sbr.rel (0) target = $region17
    $region16: #{tpu_custom_call.1} parent=1 // pred_region
      %s45 = ssub.s32 8192, 8192
      %46 = vsyncadd [#allocation6], %s45
      %s47 = sshll.u32 [#allocation7], 4
      %s48 = int_to_ptr.vmem [resolvable:$true] %s47
      %53 = dma.hbm_to_vmem [thread:$0]  %s3, 8192, %s48, [#allocation6], 128, 128, 8
    $region17: #{tpu_custom_call.1} parent=1 // pred_fallthru
      _
    // Predicated region
    $region18: #{tpu_custom_call.1} parent=1 // pred_check
      _
    $region19: #{tpu_custom_call.1} parent=1 // pred_check_branch
      %55 = sbr.rel (0) target = $region21
    $region20: #{tpu_custom_call.1} parent=1 // pred_region
      _
    $region21: #{tpu_custom_call.1} parent=1 // pred_fallthru
      _
    // Predicated region
    $region22: #{tpu_custom_call.1} parent=1 // pred_check
      _
    $region23: #{tpu_custom_call.1} parent=1 // pred_check_branch
      %57 = sbr.rel (0) target = $region25
    $region24: #{tpu_custom_call.1} parent=1 // pred_region
      %s59 = ssub.s32 4096, 4096
      %60 = vsyncadd [#allocation9], %s59
      %s61 = sshll.u32 [#allocation8], 4
      %s62 = int_to_ptr.vmem [resolvable:$true] %s61
      %67 = dma.hbm_to_vmem [thread:$0]  %s5, 4096, %s62, [#allocation9], 128, 128, 8
    $region25: #{tpu_custom_call.1} parent=1 // pred_fallthru
      _
    // Predicated region
    $region26: #{tpu_custom_call.1} parent=1 // pred_check
      _
    $region27: #{tpu_custom_call.1} parent=1 // pred_check_branch
      %69 = sbr.rel (0) target = $region29
    $region28: #{tpu_custom_call.1} parent=1 // pred_region
      _
    $region29: #{tpu_custom_call.1} parent=1 // pred_fallthru
      _
    // Predicated region
    $region30: #{tpu_custom_call.1} parent=1 // pred_check
      _
    $region31: #{tpu_custom_call.1} parent=1 // pred_check_branch
      %71 = sbr.rel (0) target = $region33
    $region32: #{tpu_custom_call.1} parent=1 // pred_region
      %72 = dma.done [#allocation3], 1536
    $region33: #{tpu_custom_call.1} parent=1 // pred_fallthru
      _
    // Predicated region
    $region34: #{tpu_custom_call.1} parent=1 // pred_check
      _
    $region35: #{tpu_custom_call.1} parent=1 // pred_check_branch
      %74 = sbr.rel (0) target = $region37
    $region36: #{tpu_custom_call.1} parent=1 // pred_region
      %75 = dma.done [#allocation6], 24576
    $region37: #{tpu_custom_call.1} parent=1 // pred_fallthru
      _
    // Predicated region
    $region38: #{tpu_custom_call.1} parent=1 // pred_check
      _
    $region39: #{tpu_custom_call.1} parent=1 // pred_check_branch
      %77 = sbr.rel (0) target = $region41
    $region40: #{tpu_custom_call.1} parent=1 // pred_region
      %78 = dma.done [#allocation6], 8192
    $region41: #{tpu_custom_call.1} parent=1 // pred_fallthru
      _
    // Predicated region
    $region42: #{tpu_custom_call.1} parent=1 // pred_check
      _
    $region43: #{tpu_custom_call.1} parent=1 // pred_check_branch
      %80 = sbr.rel (0) target = $region45
    $region44: #{tpu_custom_call.1} parent=1 // pred_region
      %81 = dma.done [#allocation9], 4096
    $region45: #{tpu_custom_call.1} parent=1 // pred_fallthru
      _
    %v82 = vld [vmem:[#allocation2] sm:$0xff]
    %v83 = vld [vmem:[#allocation2 + $0x8] sm:$0xff]
    %v84 = vld [vmem:[#allocation2 + $0x10] sm:$0xff]
    %v85 = vld [vmem:[#allocation2 + $0x18] sm:$0xff]
    %v86 = vld [vmem:[#allocation2 + $0x20] sm:$0xff]
    %v87 = vld [vmem:[#allocation2 + $0x28] sm:$0xff]
    %v88 = vld [vmem:[#allocation2 + $0x30] sm:$0xff]
    %v89 = vld [vmem:[#allocation2 + $0x38] sm:$0xff]
    %v90 = vld [vmem:[#allocation2 + $0x40] sm:$0xff]
    %v91 = vld [vmem:[#allocation2 + $0x48] sm:$0xff]
    %v92 = vld [vmem:[#allocation2 + $0x50] sm:$0xff]
    %v93 = vld [vmem:[#allocation2 + $0x58] sm:$0xff]
    %v94 = vpack.c.bf16 %v88, %v82
    %v95 = vpack.c.bf16 %v89, %v83
    %v96 = vpack.c.bf16 %v90, %v84
    %v97 = vpack.c.bf16 %v91, %v85
    %v98 = vpack.c.bf16 %v92, %v86
    %v99 = vpack.c.bf16 %v93, %v87
    %v100 = vld [vmem:[#allocation5] sm:$0xff]
    %v101 = vld [vmem:[#allocation5 + $0x8] sm:$0xff]
    %v102 = vld [vmem:[#allocation5 + $0x10] sm:$0xff]
    %v103 = vld [vmem:[#allocation5 + $0x18] sm:$0xff]
    %v104 = vld [vmem:[#allocation5 + $0x20] sm:$0xff]
    %v105 = vld [vmem:[#allocation5 + $0x28] sm:$0xff]
    %v106 = vld [vmem:[#allocation5 + $0x30] sm:$0xff]
    %v107 = vld [vmem:[#allocation5 + $0x38] sm:$0xff]
    %v108 = vld [vmem:[#allocation5 + $0x40] sm:$0xff]
    %v109 = vld [vmem:[#allocation5 + $0x48] sm:$0xff]
    %v110 = vld [vmem:[#allocation5 + $0x50] sm:$0xff]
    %v111 = vld [vmem:[#allocation5 + $0x58] sm:$0xff]
    %v112 = vld [vmem:[#allocation5 + $0x60] sm:$0xff]
    %v113 = vld [vmem:[#allocation5 + $0x68] sm:$0xff]
    %v114 = vld [vmem:[#allocation5 + $0x70] sm:$0xff]
    %v115 = vld [vmem:[#allocation5 + $0x78] sm:$0xff]
    %v116 = vld [vmem:[#allocation5 + $0x80] sm:$0xff]
    %v117 = vld [vmem:[#allocation5 + $0x88] sm:$0xff]
    %v118 = vld [vmem:[#allocation5 + $0x90] sm:$0xff]
    %v119 = vld [vmem:[#allocation5 + $0x98] sm:$0xff]
    %v120 = vld [vmem:[#allocation5 + $0xa0] sm:$0xff]
    %v121 = vld [vmem:[#allocation5 + $0xa8] sm:$0xff]
    %v122 = vld [vmem:[#allocation5 + $0xb0] sm:$0xff]
    %v123 = vld [vmem:[#allocation5 + $0xb8] sm:$0xff]
    %v124 = vld [vmem:[#allocation5 + $0xc0] sm:$0xff]
    %v125 = vld [vmem:[#allocation5 + $0xc8] sm:$0xff]
    %v126 = vld [vmem:[#allocation5 + $0xd0] sm:$0xff]
    %v127 = vld [vmem:[#allocation5 + $0xd8] sm:$0xff]
    %v128 = vld [vmem:[#allocation5 + $0xe0] sm:$0xff]
    %v129 = vld [vmem:[#allocation5 + $0xe8] sm:$0xff]
    %v130 = vld [vmem:[#allocation5 + $0xf0] sm:$0xff]
    %v131 = vld [vmem:[#allocation5 + $0xf8] sm:$0xff]
    %v132 = vld [vmem:[#allocation5 + $0x100] sm:$0xff]
    %v133 = vld [vmem:[#allocation5 + $0x108] sm:$0xff]
    %v134 = vld [vmem:[#allocation5 + $0x110] sm:$0xff]
    %v135 = vld [vmem:[#allocation5 + $0x118] sm:$0xff]
    %v136 = vld [vmem:[#allocation5 + $0x120] sm:$0xff]
    %v137 = vld [vmem:[#allocation5 + $0x128] sm:$0xff]
    %v138 = vld [vmem:[#allocation5 + $0x130] sm:$0xff]
    %v139 = vld [vmem:[#allocation5 + $0x138] sm:$0xff]
    %v140 = vld [vmem:[#allocation5 + $0x140] sm:$0xff]
    %v141 = vld [vmem:[#allocation5 + $0x148] sm:$0xff]
    %v142 = vld [vmem:[#allocation5 + $0x150] sm:$0xff]
    %v143 = vld [vmem:[#allocation5 + $0x158] sm:$0xff]
    %v144 = vld [vmem:[#allocation5 + $0x160] sm:$0xff]
    %v145 = vld [vmem:[#allocation5 + $0x168] sm:$0xff]
    %v146 = vld [vmem:[#allocation5 + $0x170] sm:$0xff]
    %v147 = vld [vmem:[#allocation5 + $0x178] sm:$0xff]
    %v148 = vld [vmem:[#allocation5 + $0x180] sm:$0xff]
    %v149 = vld [vmem:[#allocation5 + $0x188] sm:$0xff]
    %v150 = vld [vmem:[#allocation5 + $0x190] sm:$0xff]
    %v151 = vld [vmem:[#allocation5 + $0x198] sm:$0xff]
    %v152 = vld [vmem:[#allocation5 + $0x1a0] sm:$0xff]
    %v153 = vld [vmem:[#allocation5 + $0x1a8] sm:$0xff]
    %v154 = vld [vmem:[#allocation5 + $0x1b0] sm:$0xff]
    %v155 = vld [vmem:[#allocation5 + $0x1b8] sm:$0xff]
    %v156 = vld [vmem:[#allocation5 + $0x1c0] sm:$0xff]
    %v157 = vld [vmem:[#allocation5 + $0x1c8] sm:$0xff]
    %v158 = vld [vmem:[#allocation5 + $0x1d0] sm:$0xff]
    %v159 = vld [vmem:[#allocation5 + $0x1d8] sm:$0xff]
    %v160 = vld [vmem:[#allocation5 + $0x1e0] sm:$0xff]
    %v161 = vld [vmem:[#allocation5 + $0x1e8] sm:$0xff]
    %v162 = vld [vmem:[#allocation5 + $0x1f0] sm:$0xff]
    %v163 = vld [vmem:[#allocation5 + $0x1f8] sm:$0xff]
    %v164 = vld [vmem:[#allocation5 + $0x200] sm:$0xff]
    %v165 = vld [vmem:[#allocation5 + $0x208] sm:$0xff]
    %v166 = vld [vmem:[#allocation5 + $0x210] sm:$0xff]
    %v167 = vld [vmem:[#allocation5 + $0x218] sm:$0xff]
    %v168 = vld [vmem:[#allocation5 + $0x220] sm:$0xff]
    %v169 = vld [vmem:[#allocation5 + $0x228] sm:$0xff]
    %v170 = vld [vmem:[#allocation5 + $0x230] sm:$0xff]
    %v171 = vld [vmem:[#allocation5 + $0x238] sm:$0xff]
    %v172 = vld [vmem:[#allocation5 + $0x240] sm:$0xff]
    %v173 = vld [vmem:[#allocation5 + $0x248] sm:$0xff]
    %v174 = vld [vmem:[#allocation5 + $0x250] sm:$0xff]
    %v175 = vld [vmem:[#allocation5 + $0x258] sm:$0xff]
    %v176 = vld [vmem:[#allocation5 + $0x260] sm:$0xff]
    %v177 = vld [vmem:[#allocation5 + $0x268] sm:$0xff]
    %v178 = vld [vmem:[#allocation5 + $0x270] sm:$0xff]
    %v179 = vld [vmem:[#allocation5 + $0x278] sm:$0xff]
    %v180 = vld [vmem:[#allocation5 + $0x280] sm:$0xff]
    %v181 = vld [vmem:[#allocation5 + $0x288] sm:$0xff]
    %v182 = vld [vmem:[#allocation5 + $0x290] sm:$0xff]
    %v183 = vld [vmem:[#allocation5 + $0x298] sm:$0xff]
    %v184 = vld [vmem:[#allocation5 + $0x2a0] sm:$0xff]
    %v185 = vld [vmem:[#allocation5 + $0x2a8] sm:$0xff]
    %v186 = vld [vmem:[#allocation5 + $0x2b0] sm:$0xff]
    %v187 = vld [vmem:[#allocation5 + $0x2b8] sm:$0xff]
    %v188 = vld [vmem:[#allocation5 + $0x2c0] sm:$0xff]
    %v189 = vld [vmem:[#allocation5 + $0x2c8] sm:$0xff]
    %v190 = vld [vmem:[#allocation5 + $0x2d0] sm:$0xff]
    %v191 = vld [vmem:[#allocation5 + $0x2d8] sm:$0xff]
    %v192 = vld [vmem:[#allocation5 + $0x2e0] sm:$0xff]
    %v193 = vld [vmem:[#allocation5 + $0x2e8] sm:$0xff]
    %v194 = vld [vmem:[#allocation5 + $0x2f0] sm:$0xff]
    %v195 = vld [vmem:[#allocation5 + $0x2f8] sm:$0xff]
    %v196 = vld [vmem:[#allocation5 + $0x300] sm:$0xff]
    %v197 = vld [vmem:[#allocation5 + $0x308] sm:$0xff]
    %v198 = vld [vmem:[#allocation5 + $0x310] sm:$0xff]
    %v199 = vld [vmem:[#allocation5 + $0x318] sm:$0xff]
    %v200 = vld [vmem:[#allocation5 + $0x320] sm:$0xff]
    %v201 = vld [vmem:[#allocation5 + $0x328] sm:$0xff]
    %v202 = vld [vmem:[#allocation5 + $0x330] sm:$0xff]
    %v203 = vld [vmem:[#allocation5 + $0x338] sm:$0xff]
    %v204 = vld [vmem:[#allocation5 + $0x340] sm:$0xff]
    %v205 = vld [vmem:[#allocation5 + $0x348] sm:$0xff]
    %v206 = vld [vmem:[#allocation5 + $0x350] sm:$0xff]
    %v207 = vld [vmem:[#allocation5 + $0x358] sm:$0xff]
    %v208 = vld [vmem:[#allocation5 + $0x360] sm:$0xff]
    %v209 = vld [vmem:[#allocation5 + $0x368] sm:$0xff]
    %v210 = vld [vmem:[#allocation5 + $0x370] sm:$0xff]
    %v211 = vld [vmem:[#allocation5 + $0x378] sm:$0xff]
    %v212 = vld [vmem:[#allocation5 + $0x380] sm:$0xff]
    %v213 = vld [vmem:[#allocation5 + $0x388] sm:$0xff]
    %v214 = vld [vmem:[#allocation5 + $0x390] sm:$0xff]
    %v215 = vld [vmem:[#allocation5 + $0x398] sm:$0xff]
    %v216 = vld [vmem:[#allocation5 + $0x3a0] sm:$0xff]
    %v217 = vld [vmem:[#allocation5 + $0x3a8] sm:$0xff]
    %v218 = vld [vmem:[#allocation5 + $0x3b0] sm:$0xff]
    %v219 = vld [vmem:[#allocation5 + $0x3b8] sm:$0xff]
    %v220 = vld [vmem:[#allocation5 + $0x3c0] sm:$0xff]
    %v221 = vld [vmem:[#allocation5 + $0x3c8] sm:$0xff]
    %v222 = vld [vmem:[#allocation5 + $0x3d0] sm:$0xff]
    %v223 = vld [vmem:[#allocation5 + $0x3d8] sm:$0xff]
    %v224 = vld [vmem:[#allocation5 + $0x3e0] sm:$0xff]
    %v225 = vld [vmem:[#allocation5 + $0x3e8] sm:$0xff]
    %v226 = vld [vmem:[#allocation5 + $0x3f0] sm:$0xff]
    %v227 = vld [vmem:[#allocation5 + $0x3f8] sm:$0xff]
    %v228 = vld [vmem:[#allocation5 + $0x400] sm:$0xff]
    %v229 = vld [vmem:[#allocation5 + $0x408] sm:$0xff]
    %v230 = vld [vmem:[#allocation5 + $0x410] sm:$0xff]
    %v231 = vld [vmem:[#allocation5 + $0x418] sm:$0xff]
    %v232 = vld [vmem:[#allocation5 + $0x420] sm:$0xff]
    %v233 = vld [vmem:[#allocation5 + $0x428] sm:$0xff]
    %v234 = vld [vmem:[#allocation5 + $0x430] sm:$0xff]
    %v235 = vld [vmem:[#allocation5 + $0x438] sm:$0xff]
    %v236 = vld [vmem:[#allocation5 + $0x440] sm:$0xff]
    %v237 = vld [vmem:[#allocation5 + $0x448] sm:$0xff]
    %v238 = vld [vmem:[#allocation5 + $0x450] sm:$0xff]
    %v239 = vld [vmem:[#allocation5 + $0x458] sm:$0xff]
    %v240 = vld [vmem:[#allocation5 + $0x460] sm:$0xff]
    %v241 = vld [vmem:[#allocation5 + $0x468] sm:$0xff]
    %v242 = vld [vmem:[#allocation5 + $0x470] sm:$0xff]
    %v243 = vld [vmem:[#allocation5 + $0x478] sm:$0xff]
    %v244 = vld [vmem:[#allocation5 + $0x480] sm:$0xff]
    %v245 = vld [vmem:[#allocation5 + $0x488] sm:$0xff]
    %v246 = vld [vmem:[#allocation5 + $0x490] sm:$0xff]
    %v247 = vld [vmem:[#allocation5 + $0x498] sm:$0xff]
    %v248 = vld [vmem:[#allocation5 + $0x4a0] sm:$0xff]
    %v249 = vld [vmem:[#allocation5 + $0x4a8] sm:$0xff]
    %v250 = vld [vmem:[#allocation5 + $0x4b0] sm:$0xff]
    %v251 = vld [vmem:[#allocation5 + $0x4b8] sm:$0xff]
    %v252 = vld [vmem:[#allocation5 + $0x4c0] sm:$0xff]
    %v253 = vld [vmem:[#allocation5 + $0x4c8] sm:$0xff]
    %v254 = vld [vmem:[#allocation5 + $0x4d0] sm:$0xff]
    %v255 = vld [vmem:[#allocation5 + $0x4d8] sm:$0xff]
    %v256 = vld [vmem:[#allocation5 + $0x4e0] sm:$0xff]
    %v257 = vld [vmem:[#allocation5 + $0x4e8] sm:$0xff]
    %v258 = vld [vmem:[#allocation5 + $0x4f0] sm:$0xff]
    %v259 = vld [vmem:[#allocation5 + $0x4f8] sm:$0xff]
    %v260 = vld [vmem:[#allocation5 + $0x500] sm:$0xff]
    %v261 = vld [vmem:[#allocation5 + $0x508] sm:$0xff]
    %v262 = vld [vmem:[#allocation5 + $0x510] sm:$0xff]
    %v263 = vld [vmem:[#allocation5 + $0x518] sm:$0xff]
    %v264 = vld [vmem:[#allocation5 + $0x520] sm:$0xff]
    %v265 = vld [vmem:[#allocation5 + $0x528] sm:$0xff]
    %v266 = vld [vmem:[#allocation5 + $0x530] sm:$0xff]
    %v267 = vld [vmem:[#allocation5 + $0x538] sm:$0xff]
    %v268 = vld [vmem:[#allocation5 + $0x540] sm:$0xff]
    %v269 = vld [vmem:[#allocation5 + $0x548] sm:$0xff]
    %v270 = vld [vmem:[#allocation5 + $0x550] sm:$0xff]
    %v271 = vld [vmem:[#allocation5 + $0x558] sm:$0xff]
    %v272 = vld [vmem:[#allocation5 + $0x560] sm:$0xff]
    %v273 = vld [vmem:[#allocation5 + $0x568] sm:$0xff]
    %v274 = vld [vmem:[#allocation5 + $0x570] sm:$0xff]
    %v275 = vld [vmem:[#allocation5 + $0x578] sm:$0xff]
    %v276 = vld [vmem:[#allocation5 + $0x580] sm:$0xff]
    %v277 = vld [vmem:[#allocation5 + $0x588] sm:$0xff]
    %v278 = vld [vmem:[#allocation5 + $0x590] sm:$0xff]
    %v279 = vld [vmem:[#allocation5 + $0x598] sm:$0xff]
    %v280 = vld [vmem:[#allocation5 + $0x5a0] sm:$0xff]
    %v281 = vld [vmem:[#allocation5 + $0x5a8] sm:$0xff]
    %v282 = vld [vmem:[#allocation5 + $0x5b0] sm:$0xff]
    %v283 = vld [vmem:[#allocation5 + $0x5b8] sm:$0xff]
    %v284 = vld [vmem:[#allocation5 + $0x5c0] sm:$0xff]
    %v285 = vld [vmem:[#allocation5 + $0x5c8] sm:$0xff]
    %v286 = vld [vmem:[#allocation5 + $0x5d0] sm:$0xff]
    %v287 = vld [vmem:[#allocation5 + $0x5d8] sm:$0xff]
    %v288 = vld [vmem:[#allocation5 + $0x5e0] sm:$0xff]
    %v289 = vld [vmem:[#allocation5 + $0x5e8] sm:$0xff]
    %v290 = vld [vmem:[#allocation5 + $0x5f0] sm:$0xff]
    %v291 = vld [vmem:[#allocation5 + $0x5f8] sm:$0xff]
    %v292 = vld [vmem:[%s2] sm:$0xf]
    %v294 = vlaneseq
    %v295 = vshrl.u32 %v294, 7
    %v296 = vsub.s32 0, %v295
    %v297 = vrot.slane %v292, %v296
    %v298 = vlaneseq
    %v299 = vshrl.u32 %v298, 7
    %v300 = vsub.s32 1, %v299
    %v301 = vrot.slane %v292, %v300
    %v302 = vlaneseq
    %v303 = vshrl.u32 %v302, 7
    %v304 = vsub.s32 2, %v303
    %v305 = vrot.slane %v292, %v304
    %v306 = vlaneseq
    %v307 = vshrl.u32 %v306, 7
    %v308 = vsub.s32 3, %v307
    %v309 = vrot.slane %v292, %v308
    %v506 = vunpack.c.l.b16 %v100
    %v507 = vunpack.c.h.b16 %v100
    %v508 = vunpack.c.l.b16 %v101
    %v509 = vunpack.c.h.b16 %v101
    %v510 = vunpack.c.l.b16 %v102
    %v511 = vunpack.c.h.b16 %v102
    %v512 = vunpack.c.l.b16 %v103
    %v513 = vunpack.c.h.b16 %v103
    %v514 = vunpack.c.l.b16 %v104
    %v515 = vunpack.c.h.b16 %v104
    %v516 = vunpack.c.l.b16 %v105
    %v517 = vunpack.c.h.b16 %v105
    %v518 = vunpack.c.l.b16 %v106
    %v519 = vunpack.c.h.b16 %v106
    %v520 = vunpack.c.l.b16 %v107
    %v521 = vunpack.c.h.b16 %v107
    %v522 = vunpack.c.l.b16 %v108
    %v523 = vunpack.c.h.b16 %v108
    %v524 = vunpack.c.l.b16 %v109
    %v525 = vunpack.c.h.b16 %v109
    %v526 = vunpack.c.l.b16 %v110
    %v527 = vunpack.c.h.b16 %v110
    %v528 = vunpack.c.l.b16 %v111
    %v529 = vunpack.c.h.b16 %v111
    %v530 = vunpack.c.l.b16 %v112
    %v531 = vunpack.c.h.b16 %v112
    %v532 = vunpack.c.l.b16 %v113
    %v533 = vunpack.c.h.b16 %v113
    %v534 = vunpack.c.l.b16 %v114
    %v535 = vunpack.c.h.b16 %v114
    %v536 = vunpack.c.l.b16 %v115
    %v537 = vunpack.c.h.b16 %v115
    %v538 = vunpack.c.l.b16 %v116
    %v539 = vunpack.c.h.b16 %v116
    %v540 = vunpack.c.l.b16 %v117
    %v541 = vunpack.c.h.b16 %v117
    %v542 = vunpack.c.l.b16 %v118
    %v543 = vunpack.c.h.b16 %v118
    %v544 = vunpack.c.l.b16 %v119
    %v545 = vunpack.c.h.b16 %v119
    %v546 = vunpack.c.l.b16 %v120
    %v547 = vunpack.c.h.b16 %v120
    %v548 = vunpack.c.l.b16 %v121
    %v549 = vunpack.c.h.b16 %v121
    %v550 = vunpack.c.l.b16 %v122
    %v551 = vunpack.c.h.b16 %v122
    %v552 = vunpack.c.l.b16 %v123
    %v553 = vunpack.c.h.b16 %v123
    %v554 = vunpack.c.l.b16 %v124
    %v555 = vunpack.c.h.b16 %v124
    %v556 = vunpack.c.l.b16 %v125
    %v557 = vunpack.c.h.b16 %v125
    %v558 = vunpack.c.l.b16 %v126
    %v559 = vunpack.c.h.b16 %v126
    %v560 = vunpack.c.l.b16 %v127
    %v561 = vunpack.c.h.b16 %v127
    %v562 = vunpack.c.l.b16 %v128
    %v563 = vunpack.c.h.b16 %v128
    %v564 = vunpack.c.l.b16 %v129
    %v565 = vunpack.c.h.b16 %v129
    %v566 = vunpack.c.l.b16 %v130
    %v567 = vunpack.c.h.b16 %v130
    %v568 = vunpack.c.l.b16 %v131
    %v569 = vunpack.c.h.b16 %v131
    %v570 = vunpack.c.l.b16 %v132
    %v571 = vunpack.c.h.b16 %v132
    %v572 = vunpack.c.l.b16 %v133
    %v573 = vunpack.c.h.b16 %v133
    %v574 = vunpack.c.l.b16 %v134
    %v575 = vunpack.c.h.b16 %v134
    %v576 = vunpack.c.l.b16 %v135
    %v577 = vunpack.c.h.b16 %v135
    %v578 = vunpack.c.l.b16 %v136
    %v579 = vunpack.c.h.b16 %v136
    %v580 = vunpack.c.l.b16 %v137
    %v581 = vunpack.c.h.b16 %v137
    %v582 = vunpack.c.l.b16 %v138
    %v583 = vunpack.c.h.b16 %v138
    %v584 = vunpack.c.l.b16 %v139
    %v585 = vunpack.c.h.b16 %v139
    %v586 = vunpack.c.l.b16 %v140
    %v587 = vunpack.c.h.b16 %v140
    %v588 = vunpack.c.l.b16 %v141
    %v589 = vunpack.c.h.b16 %v141
    %v590 = vunpack.c.l.b16 %v142
    %v591 = vunpack.c.h.b16 %v142
    %v592 = vunpack.c.l.b16 %v143
    %v593 = vunpack.c.h.b16 %v143
    %v594 = vunpack.c.l.b16 %v144
    %v595 = vunpack.c.h.b16 %v144
    %v596 = vunpack.c.l.b16 %v145
    %v597 = vunpack.c.h.b16 %v145
    %v598 = vunpack.c.l.b16 %v146
    %v599 = vunpack.c.h.b16 %v146
    %v600 = vunpack.c.l.b16 %v147
    %v601 = vunpack.c.h.b16 %v147
    %v602 = vunpack.c.l.b16 %v148
    %v603 = vunpack.c.h.b16 %v148
    %v604 = vunpack.c.l.b16 %v149
    %v605 = vunpack.c.h.b16 %v149
    %v606 = vunpack.c.l.b16 %v150
    %v607 = vunpack.c.h.b16 %v150
    %v608 = vunpack.c.l.b16 %v151
    %v609 = vunpack.c.h.b16 %v151
    %v610 = vunpack.c.l.b16 %v152
    %v611 = vunpack.c.h.b16 %v152
    %v612 = vunpack.c.l.b16 %v153
    %v613 = vunpack.c.h.b16 %v153
    %v614 = vunpack.c.l.b16 %v154
    %v615 = vunpack.c.h.b16 %v154
    %v616 = vunpack.c.l.b16 %v155
    %v617 = vunpack.c.h.b16 %v155
    %v618 = vunpack.c.l.b16 %v156
    %v619 = vunpack.c.h.b16 %v156
    %v620 = vunpack.c.l.b16 %v157
    %v621 = vunpack.c.h.b16 %v157
    %v622 = vunpack.c.l.b16 %v158
    %v623 = vunpack.c.h.b16 %v158
    %v624 = vunpack.c.l.b16 %v159
    %v625 = vunpack.c.h.b16 %v159
    %v626 = vunpack.c.l.b16 %v160
    %v627 = vunpack.c.h.b16 %v160
    %v628 = vunpack.c.l.b16 %v161
    %v629 = vunpack.c.h.b16 %v161
    %v630 = vunpack.c.l.b16 %v162
    %v631 = vunpack.c.h.b16 %v162
    %v632 = vunpack.c.l.b16 %v163
    %v633 = vunpack.c.h.b16 %v163
    %v634 = vunpack.c.l.b16 %v164
    %v635 = vunpack.c.h.b16 %v164
    %v636 = vunpack.c.l.b16 %v165
    %v637 = vunpack.c.h.b16 %v165
    %v638 = vunpack.c.l.b16 %v166
    %v639 = vunpack.c.h.b16 %v166
    %v640 = vunpack.c.l.b16 %v167
    %v641 = vunpack.c.h.b16 %v167
    %v642 = vunpack.c.l.b16 %v168
    %v643 = vunpack.c.h.b16 %v168
    %v644 = vunpack.c.l.b16 %v169
    %v645 = vunpack.c.h.b16 %v169
    %v646 = vunpack.c.l.b16 %v170
    %v647 = vunpack.c.h.b16 %v170
    %v648 = vunpack.c.l.b16 %v171
    %v649 = vunpack.c.h.b16 %v171
    %v650 = vunpack.c.l.b16 %v172
    %v651 = vunpack.c.h.b16 %v172
    %v652 = vunpack.c.l.b16 %v173
    %v653 = vunpack.c.h.b16 %v173
    %v654 = vunpack.c.l.b16 %v174
    %v655 = vunpack.c.h.b16 %v174
    %v656 = vunpack.c.l.b16 %v175
    %v657 = vunpack.c.h.b16 %v175
    %v658 = vunpack.c.l.b16 %v176
    %v659 = vunpack.c.h.b16 %v176
    %v660 = vunpack.c.l.b16 %v177
    %v661 = vunpack.c.h.b16 %v177
    %v662 = vunpack.c.l.b16 %v178
    %v663 = vunpack.c.h.b16 %v178
    %v664 = vunpack.c.l.b16 %v179
    %v665 = vunpack.c.h.b16 %v179
    %v666 = vunpack.c.l.b16 %v180
    %v667 = vunpack.c.h.b16 %v180
    %v668 = vunpack.c.l.b16 %v181
    %v669 = vunpack.c.h.b16 %v181
    %v670 = vunpack.c.l.b16 %v182
    %v671 = vunpack.c.h.b16 %v182
    %v672 = vunpack.c.l.b16 %v183
    %v673 = vunpack.c.h.b16 %v183
    %v674 = vunpack.c.l.b16 %v184
    %v675 = vunpack.c.h.b16 %v184
    %v676 = vunpack.c.l.b16 %v185
    %v677 = vunpack.c.h.b16 %v185
    %v678 = vunpack.c.l.b16 %v186
    %v679 = vunpack.c.h.b16 %v186
    %v680 = vunpack.c.l.b16 %v187
    %v681 = vunpack.c.h.b16 %v187
    %v682 = vunpack.c.l.b16 %v188
    %v683 = vunpack.c.h.b16 %v188
    %v684 = vunpack.c.l.b16 %v189
    %v685 = vunpack.c.h.b16 %v189
    %v686 = vunpack.c.l.b16 %v190
    %v687 = vunpack.c.h.b16 %v190
    %v688 = vunpack.c.l.b16 %v191
    %v689 = vunpack.c.h.b16 %v191
    %v690 = vunpack.c.l.b16 %v192
    %v691 = vunpack.c.h.b16 %v192
    %v692 = vunpack.c.l.b16 %v193
    %v693 = vunpack.c.h.b16 %v193
    %v694 = vunpack.c.l.b16 %v194
    %v695 = vunpack.c.h.b16 %v194
    %v696 = vunpack.c.l.b16 %v195
    %v697 = vunpack.c.h.b16 %v195
    %v698 = vunpack.c.l.b16 %v196
    %v699 = vunpack.c.h.b16 %v196
    %v700 = vunpack.c.l.b16 %v197
    %v701 = vunpack.c.h.b16 %v197
    %v702 = vunpack.c.l.b16 %v198
    %v703 = vunpack.c.h.b16 %v198
    %v704 = vunpack.c.l.b16 %v199
    %v705 = vunpack.c.h.b16 %v199
    %v706 = vunpack.c.l.b16 %v200
    %v707 = vunpack.c.h.b16 %v200
    %v708 = vunpack.c.l.b16 %v201
    %v709 = vunpack.c.h.b16 %v201
    %v710 = vunpack.c.l.b16 %v202
    %v711 = vunpack.c.h.b16 %v202
    %v712 = vunpack.c.l.b16 %v203
    %v713 = vunpack.c.h.b16 %v203
    %v714 = vunpack.c.l.b16 %v204
    %v715 = vunpack.c.h.b16 %v204
    %v716 = vunpack.c.l.b16 %v205
    %v717 = vunpack.c.h.b16 %v205
    %v718 = vunpack.c.l.b16 %v206
    %v719 = vunpack.c.h.b16 %v206
    %v720 = vunpack.c.l.b16 %v207
    %v721 = vunpack.c.h.b16 %v207
    %v722 = vunpack.c.l.b16 %v208
    %v723 = vunpack.c.h.b16 %v208
    %v724 = vunpack.c.l.b16 %v209
    %v725 = vunpack.c.h.b16 %v209
    %v726 = vunpack.c.l.b16 %v210
    %v727 = vunpack.c.h.b16 %v210
    %v728 = vunpack.c.l.b16 %v211
    %v729 = vunpack.c.h.b16 %v211
    %v730 = vunpack.c.l.b16 %v212
    %v731 = vunpack.c.h.b16 %v212
    %v732 = vunpack.c.l.b16 %v213
    %v733 = vunpack.c.h.b16 %v213
    %v734 = vunpack.c.l.b16 %v214
    %v735 = vunpack.c.h.b16 %v214
    %v736 = vunpack.c.l.b16 %v215
    %v737 = vunpack.c.h.b16 %v215
    %v738 = vunpack.c.l.b16 %v216
    %v739 = vunpack.c.h.b16 %v216
    %v740 = vunpack.c.l.b16 %v217
    %v741 = vunpack.c.h.b16 %v217
    %v742 = vunpack.c.l.b16 %v218
    %v743 = vunpack.c.h.b16 %v218
    %v744 = vunpack.c.l.b16 %v219
    %v745 = vunpack.c.h.b16 %v219
    %v746 = vunpack.c.l.b16 %v220
    %v747 = vunpack.c.h.b16 %v220
    %v748 = vunpack.c.l.b16 %v221
    %v749 = vunpack.c.h.b16 %v221
    %v750 = vunpack.c.l.b16 %v222
    %v751 = vunpack.c.h.b16 %v222
    %v752 = vunpack.c.l.b16 %v223
    %v753 = vunpack.c.h.b16 %v223
    %v754 = vunpack.c.l.b16 %v224
    %v755 = vunpack.c.h.b16 %v224
    %v756 = vunpack.c.l.b16 %v225
    %v757 = vunpack.c.h.b16 %v225
    %v758 = vunpack.c.l.b16 %v226
    %v759 = vunpack.c.h.b16 %v226
    %v760 = vunpack.c.l.b16 %v227
    %v761 = vunpack.c.h.b16 %v227
    %v762 = vunpack.c.l.b16 %v228
    %v763 = vunpack.c.h.b16 %v228
    %v764 = vunpack.c.l.b16 %v229
    %v765 = vunpack.c.h.b16 %v229
    %v766 = vunpack.c.l.b16 %v230
    %v767 = vunpack.c.h.b16 %v230
    %v768 = vunpack.c.l.b16 %v231
    %v769 = vunpack.c.h.b16 %v231
    %v770 = vunpack.c.l.b16 %v232
    %v771 = vunpack.c.h.b16 %v232
    %v772 = vunpack.c.l.b16 %v233
    %v773 = vunpack.c.h.b16 %v233
    %v774 = vunpack.c.l.b16 %v234
    %v775 = vunpack.c.h.b16 %v234
    %v776 = vunpack.c.l.b16 %v235
    %v777 = vunpack.c.h.b16 %v235
    %v778 = vunpack.c.l.b16 %v236
    %v779 = vunpack.c.h.b16 %v236
    %v780 = vunpack.c.l.b16 %v237
    %v781 = vunpack.c.h.b16 %v237
    %v782 = vunpack.c.l.b16 %v238
    %v783 = vunpack.c.h.b16 %v238
    %v784 = vunpack.c.l.b16 %v239
    %v785 = vunpack.c.h.b16 %v239
    %v786 = vunpack.c.l.b16 %v240
    %v787 = vunpack.c.h.b16 %v240
    %v788 = vunpack.c.l.b16 %v241
    %v789 = vunpack.c.h.b16 %v241
    %v790 = vunpack.c.l.b16 %v242
    %v791 = vunpack.c.h.b16 %v242
    %v792 = vunpack.c.l.b16 %v243
    %v793 = vunpack.c.h.b16 %v243
    %v794 = vunpack.c.l.b16 %v244
    %v795 = vunpack.c.h.b16 %v244
    %v796 = vunpack.c.l.b16 %v245
    %v797 = vunpack.c.h.b16 %v245
    %v798 = vunpack.c.l.b16 %v246
    %v799 = vunpack.c.h.b16 %v246
    %v800 = vunpack.c.l.b16 %v247
    %v801 = vunpack.c.h.b16 %v247
    %v802 = vunpack.c.l.b16 %v248
    %v803 = vunpack.c.h.b16 %v248
    %v804 = vunpack.c.l.b16 %v249
    %v805 = vunpack.c.h.b16 %v249
    %v806 = vunpack.c.l.b16 %v250
    %v807 = vunpack.c.h.b16 %v250
    %v808 = vunpack.c.l.b16 %v251
    %v809 = vunpack.c.h.b16 %v251
    %v810 = vunpack.c.l.b16 %v252
    %v811 = vunpack.c.h.b16 %v252
    %v812 = vunpack.c.l.b16 %v253
    %v813 = vunpack.c.h.b16 %v253
    %v814 = vunpack.c.l.b16 %v254
    %v815 = vunpack.c.h.b16 %v254
    %v816 = vunpack.c.l.b16 %v255
    %v817 = vunpack.c.h.b16 %v255
    %v818 = vunpack.c.l.b16 %v256
    %v819 = vunpack.c.h.b16 %v256
    %v820 = vunpack.c.l.b16 %v257
    %v821 = vunpack.c.h.b16 %v257
    %v822 = vunpack.c.l.b16 %v258
    %v823 = vunpack.c.h.b16 %v258
    %v824 = vunpack.c.l.b16 %v259
    %v825 = vunpack.c.h.b16 %v259
    %v826 = vunpack.c.l.b16 %v260
    %v827 = vunpack.c.h.b16 %v260
    %v828 = vunpack.c.l.b16 %v261
    %v829 = vunpack.c.h.b16 %v261
    %v830 = vunpack.c.l.b16 %v262
    %v831 = vunpack.c.h.b16 %v262
    %v832 = vunpack.c.l.b16 %v263
    %v833 = vunpack.c.h.b16 %v263
    %v834 = vunpack.c.l.b16 %v264
    %v835 = vunpack.c.h.b16 %v264
    %v836 = vunpack.c.l.b16 %v265
    %v837 = vunpack.c.h.b16 %v265
    %v838 = vunpack.c.l.b16 %v266
    %v839 = vunpack.c.h.b16 %v266
    %v840 = vunpack.c.l.b16 %v267
    %v841 = vunpack.c.h.b16 %v267
    %v842 = vunpack.c.l.b16 %v268
    %v843 = vunpack.c.h.b16 %v268
    %v844 = vunpack.c.l.b16 %v269
    %v845 = vunpack.c.h.b16 %v269
    %v846 = vunpack.c.l.b16 %v270
    %v847 = vunpack.c.h.b16 %v270
    %v848 = vunpack.c.l.b16 %v271
    %v849 = vunpack.c.h.b16 %v271
    %v850 = vunpack.c.l.b16 %v272
    %v851 = vunpack.c.h.b16 %v272
    %v852 = vunpack.c.l.b16 %v273
    %v853 = vunpack.c.h.b16 %v273
    %v854 = vunpack.c.l.b16 %v274
    %v855 = vunpack.c.h.b16 %v274
    %v856 = vunpack.c.l.b16 %v275
    %v857 = vunpack.c.h.b16 %v275
    %v858 = vunpack.c.l.b16 %v276
    %v859 = vunpack.c.h.b16 %v276
    %v860 = vunpack.c.l.b16 %v277
    %v861 = vunpack.c.h.b16 %v277
    %v862 = vunpack.c.l.b16 %v278
    %v863 = vunpack.c.h.b16 %v278
    %v864 = vunpack.c.l.b16 %v279
    %v865 = vunpack.c.h.b16 %v279
    %v866 = vunpack.c.l.b16 %v280
    %v867 = vunpack.c.h.b16 %v280
    %v868 = vunpack.c.l.b16 %v281
    %v869 = vunpack.c.h.b16 %v281
    %v870 = vunpack.c.l.b16 %v282
    %v871 = vunpack.c.h.b16 %v282
    %v872 = vunpack.c.l.b16 %v283
    %v873 = vunpack.c.h.b16 %v283
    %v874 = vunpack.c.l.b16 %v284
    %v875 = vunpack.c.h.b16 %v284
    %v876 = vunpack.c.l.b16 %v285
    %v877 = vunpack.c.h.b16 %v285
    %v878 = vunpack.c.l.b16 %v286
    %v879 = vunpack.c.h.b16 %v286
    %v880 = vunpack.c.l.b16 %v287
    %v881 = vunpack.c.h.b16 %v287
    %v882 = vunpack.c.l.b16 %v288
    %v883 = vunpack.c.h.b16 %v288
    %v884 = vunpack.c.l.b16 %v289
    %v885 = vunpack.c.h.b16 %v289
    %v886 = vunpack.c.l.b16 %v290
    %v887 = vunpack.c.h.b16 %v290
    %v888 = vunpack.c.l.b16 %v291
    %v889 = vunpack.c.h.b16 %v291
    %v890 = vpack.c.b16 %v510, %v506
    %v891 = vpack.c.b16 %v511, %v507
    %v892 = vpack.c.b16 %v512, %v508
    %v893 = vpack.c.b16 %v513, %v509
    %v894 = vpack.c.b16 %v518, %v514
    %v895 = vpack.c.b16 %v519, %v515
    %v896 = vpack.c.b16 %v520, %v516
    %v897 = vpack.c.b16 %v521, %v517
    %v898 = vpack.c.b16 %v526, %v522
    %v899 = vpack.c.b16 %v527, %v523
    %v900 = vpack.c.b16 %v528, %v524
    %v901 = vpack.c.b16 %v529, %v525
    %v902 = vpack.c.b16 %v534, %v530
    %v903 = vpack.c.b16 %v535, %v531
    %v904 = vpack.c.b16 %v536, %v532
    %v905 = vpack.c.b16 %v537, %v533
    %v906 = vpack.c.b16 %v542, %v538
    %v907 = vpack.c.b16 %v543, %v539
    %v908 = vpack.c.b16 %v544, %v540
    %v909 = vpack.c.b16 %v545, %v541
    %v910 = vpack.c.b16 %v550, %v546
    %v911 = vpack.c.b16 %v551, %v547
    %v912 = vpack.c.b16 %v552, %v548
    %v913 = vpack.c.b16 %v553, %v549
    %v914 = vpack.c.b16 %v558, %v554
    %v915 = vpack.c.b16 %v559, %v555
    %v916 = vpack.c.b16 %v560, %v556
    %v917 = vpack.c.b16 %v561, %v557
    %v918 = vpack.c.b16 %v566, %v562
    %v919 = vpack.c.b16 %v567, %v563
    %v920 = vpack.c.b16 %v568, %v564
    %v921 = vpack.c.b16 %v569, %v565
    %v922 = vpack.c.b16 %v574, %v570
    %v923 = vpack.c.b16 %v575, %v571
    %v924 = vpack.c.b16 %v576, %v572
    %v925 = vpack.c.b16 %v577, %v573
    %v926 = vpack.c.b16 %v582, %v578
    %v927 = vpack.c.b16 %v583, %v579
    %v928 = vpack.c.b16 %v584, %v580
    %v929 = vpack.c.b16 %v585, %v581
    %v930 = vpack.c.b16 %v590, %v586
    %v931 = vpack.c.b16 %v591, %v587
    %v932 = vpack.c.b16 %v592, %v588
    %v933 = vpack.c.b16 %v593, %v589
    %v934 = vpack.c.b16 %v598, %v594
    %v935 = vpack.c.b16 %v599, %v595
    %v936 = vpack.c.b16 %v600, %v596
    %v937 = vpack.c.b16 %v601, %v597
    %v938 = vpack.c.b16 %v606, %v602
    %v939 = vpack.c.b16 %v607, %v603
    %v940 = vpack.c.b16 %v608, %v604
    %v941 = vpack.c.b16 %v609, %v605
    %v942 = vpack.c.b16 %v614, %v610
    %v943 = vpack.c.b16 %v615, %v611
    %v944 = vpack.c.b16 %v616, %v612
    %v945 = vpack.c.b16 %v617, %v613
    %v946 = vpack.c.b16 %v622, %v618
    %v947 = vpack.c.b16 %v623, %v619
    %v948 = vpack.c.b16 %v624, %v620
    %v949 = vpack.c.b16 %v625, %v621
    %v950 = vpack.c.b16 %v630, %v626
    %v951 = vpack.c.b16 %v631, %v627
    %v952 = vpack.c.b16 %v632, %v628
    %v953 = vpack.c.b16 %v633, %v629
    %v954 = vpack.c.b16 %v638, %v634
    %v955 = vpack.c.b16 %v639, %v635
    %v956 = vpack.c.b16 %v640, %v636
    %v957 = vpack.c.b16 %v641, %v637
    %v958 = vpack.c.b16 %v646, %v642
    %v959 = vpack.c.b16 %v647, %v643
    %v960 = vpack.c.b16 %v648, %v644
    %v961 = vpack.c.b16 %v649, %v645
    %v962 = vpack.c.b16 %v654, %v650
    %v963 = vpack.c.b16 %v655, %v651
    %v964 = vpack.c.b16 %v656, %v652
    %v965 = vpack.c.b16 %v657, %v653
    %v966 = vpack.c.b16 %v662, %v658
    %v967 = vpack.c.b16 %v663, %v659
    %v968 = vpack.c.b16 %v664, %v660
    %v969 = vpack.c.b16 %v665, %v661
    %v970 = vpack.c.b16 %v670, %v666
    %v971 = vpack.c.b16 %v671, %v667
    %v972 = vpack.c.b16 %v672, %v668
    %v973 = vpack.c.b16 %v673, %v669
    %v974 = vpack.c.b16 %v678, %v674
    %v975 = vpack.c.b16 %v679, %v675
    %v976 = vpack.c.b16 %v680, %v676
    %v977 = vpack.c.b16 %v681, %v677
    %v978 = vpack.c.b16 %v686, %v682
    %v979 = vpack.c.b16 %v687, %v683
    %v980 = vpack.c.b16 %v688, %v684
    %v981 = vpack.c.b16 %v689, %v685
    %v982 = vpack.c.b16 %v694, %v690
    %v983 = vpack.c.b16 %v695, %v691
    %v984 = vpack.c.b16 %v696, %v692
    %v985 = vpack.c.b16 %v697, %v693
    %v986 = vpack.c.b16 %v702, %v698
    %v987 = vpack.c.b16 %v703, %v699
    %v988 = vpack.c.b16 %v704, %v700
    %v989 = vpack.c.b16 %v705, %v701
    %v990 = vpack.c.b16 %v710, %v706
    %v991 = vpack.c.b16 %v711, %v707
    %v992 = vpack.c.b16 %v712, %v708
    %v993 = vpack.c.b16 %v713, %v709
    %v994 = vpack.c.b16 %v718, %v714
    %v995 = vpack.c.b16 %v719, %v715
    %v996 = vpack.c.b16 %v720, %v716
    %v997 = vpack.c.b16 %v721, %v717
    %v998 = vpack.c.b16 %v726, %v722
    %v999 = vpack.c.b16 %v727, %v723
    %v1000 = vpack.c.b16 %v728, %v724
    %v1001 = vpack.c.b16 %v729, %v725
    %v1002 = vpack.c.b16 %v734, %v730
    %v1003 = vpack.c.b16 %v735, %v731
    %v1004 = vpack.c.b16 %v736, %v732
    %v1005 = vpack.c.b16 %v737, %v733
    %v1006 = vpack.c.b16 %v742, %v738
    %v1007 = vpack.c.b16 %v743, %v739
    %v1008 = vpack.c.b16 %v744, %v740
    %v1009 = vpack.c.b16 %v745, %v741
    %v1010 = vpack.c.b16 %v750, %v746
    %v1011 = vpack.c.b16 %v751, %v747
    %v1012 = vpack.c.b16 %v752, %v748
    %v1013 = vpack.c.b16 %v753, %v749
    %v1014 = vpack.c.b16 %v758, %v754
    %v1015 = vpack.c.b16 %v759, %v755
    %v1016 = vpack.c.b16 %v760, %v756
    %v1017 = vpack.c.b16 %v761, %v757
    %v1018 = vpack.c.b16 %v766, %v762
    %v1019 = vpack.c.b16 %v767, %v763
    %v1020 = vpack.c.b16 %v768, %v764
    %v1021 = vpack.c.b16 %v769, %v765
    %v1022 = vpack.c.b16 %v774, %v770
    %v1023 = vpack.c.b16 %v775, %v771
    %v1024 = vpack.c.b16 %v776, %v772
    %v1025 = vpack.c.b16 %v777, %v773
    %v1026 = vpack.c.b16 %v782, %v778
    %v1027 = vpack.c.b16 %v783, %v779
    %v1028 = vpack.c.b16 %v784, %v780
    %v1029 = vpack.c.b16 %v785, %v781
    %v1030 = vpack.c.b16 %v790, %v786
    %v1031 = vpack.c.b16 %v791, %v787
    %v1032 = vpack.c.b16 %v792, %v788
    %v1033 = vpack.c.b16 %v793, %v789
    %v1034 = vpack.c.b16 %v798, %v794
    %v1035 = vpack.c.b16 %v799, %v795
    %v1036 = vpack.c.b16 %v800, %v796
    %v1037 = vpack.c.b16 %v801, %v797
    %v1038 = vpack.c.b16 %v806, %v802
    %v1039 = vpack.c.b16 %v807, %v803
    %v1040 = vpack.c.b16 %v808, %v804
    %v1041 = vpack.c.b16 %v809, %v805
    %v1042 = vpack.c.b16 %v814, %v810
    %v1043 = vpack.c.b16 %v815, %v811
    %v1044 = vpack.c.b16 %v816, %v812
    %v1045 = vpack.c.b16 %v817, %v813
    %v1046 = vpack.c.b16 %v822, %v818
    %v1047 = vpack.c.b16 %v823, %v819
    %v1048 = vpack.c.b16 %v824, %v820
    %v1049 = vpack.c.b16 %v825, %v821
    %v1050 = vpack.c.b16 %v830, %v826
    %v1051 = vpack.c.b16 %v831, %v827
    %v1052 = vpack.c.b16 %v832, %v828
    %v1053 = vpack.c.b16 %v833, %v829
    %v1054 = vpack.c.b16 %v838, %v834
    %v1055 = vpack.c.b16 %v839, %v835
    %v1056 = vpack.c.b16 %v840, %v836
    %v1057 = vpack.c.b16 %v841, %v837
    %v1058 = vpack.c.b16 %v846, %v842
    %v1059 = vpack.c.b16 %v847, %v843
    %v1060 = vpack.c.b16 %v848, %v844
    %v1061 = vpack.c.b16 %v849, %v845
    %v1062 = vpack.c.b16 %v854, %v850
    %v1063 = vpack.c.b16 %v855, %v851
    %v1064 = vpack.c.b16 %v856, %v852
    %v1065 = vpack.c.b16 %v857, %v853
    %v1066 = vpack.c.b16 %v862, %v858
    %v1067 = vpack.c.b16 %v863, %v859
    %v1068 = vpack.c.b16 %v864, %v860
    %v1069 = vpack.c.b16 %v865, %v861
    %v1070 = vpack.c.b16 %v870, %v866
    %v1071 = vpack.c.b16 %v871, %v867
    %v1072 = vpack.c.b16 %v872, %v868
    %v1073 = vpack.c.b16 %v873, %v869
    %v1074 = vpack.c.b16 %v878, %v874
    %v1075 = vpack.c.b16 %v879, %v875
    %v1076 = vpack.c.b16 %v880, %v876
    %v1077 = vpack.c.b16 %v881, %v877
    %v1078 = vpack.c.b16 %v886, %v882
    %v1079 = vpack.c.b16 %v887, %v883
    %v1080 = vpack.c.b16 %v888, %v884
    %v1081 = vpack.c.b16 %v889, %v885
    %1274 = vmatprep.subr.bf16.mxu0 %v891
    %1275 = vmatpush1.bf16.msra.mxu0 %v890
    %1276 = vmatprep.subr.bf16.mxu0 %v895
    %1277 = vmatpush1.bf16.msra.mxu0 %v894
    %1278 = vmatprep.subr.bf16.mxu0 %v899
    %1279 = vmatpush1.bf16.msra.mxu0 %v898
    %1280 = vmatprep.subr.bf16.mxu0 %v903
    %1281 = vmatpush1.bf16.msra.mxu0 %v902
    %1282 = vmatprep.subr.bf16.mxu0 %v907
    %1283 = vmatpush1.bf16.msra.mxu0 %v906
    %1284 = vmatprep.subr.bf16.mxu0 %v911
    %1285 = vmatpush1.bf16.msra.mxu0 %v910
    %1286 = vmatprep.subr.bf16.mxu0 %v915
    %1287 = vmatpush1.bf16.msra.mxu0 %v914
    %1288 = vmatprep.subr.bf16.mxu0 %v919
    %1289 = vmatpush1.bf16.msra.mxu0 %v918
    %1290 = vmatprep.subr.bf16.mxu0 %v923
    %1291 = vmatpush1.bf16.msra.mxu0 %v922
    %1292 = vmatprep.subr.bf16.mxu0 %v927
    %1293 = vmatpush1.bf16.msra.mxu0 %v926
    %1294 = vmatprep.subr.bf16.mxu0 %v931
    %1295 = vmatpush1.bf16.msra.mxu0 %v930
    %1296 = vmatprep.subr.bf16.mxu0 %v935
    %1297 = vmatpush1.bf16.msra.mxu0 %v934
    %1298 = vmatprep.subr.bf16.mxu0 %v939
    %1299 = vmatpush1.bf16.msra.mxu0 %v938
    %1300 = vmatprep.subr.bf16.mxu0 %v943
    %1301 = vmatpush1.bf16.msra.mxu0 %v942
    %1302 = vmatprep.subr.bf16.mxu0 %v947
    %1303 = vmatpush1.bf16.msra.mxu0 %v946
    %1304 = vmatprep.subr.bf16.mxu0 %v951
    %1305 = vmatpush1.bf16.msra.mxu0 %v950
    %1306 = vmatprep.mubr.bf16.mxu0 %v95
    %1307 = vmatmul.mubr.bf16.gmra.mrb[0].mxu0 %v94
    %v1308 = vpop.f32.mrb[0].mxu0
    %v1309 = vadd.f32 %v297, %v1308
    %v1310 = vpop.f32.mrb[0].mxu0
    %v1311 = vadd.f32 %v301, %v1310
    %v1312 = vpop.f32.mrb[0].mxu0
    %v1313 = vadd.f32 %v297, %v1312
    %v1314 = vpop.f32.mrb[0].mxu0
    %v1315 = vadd.f32 %v301, %v1314
    %1316 = vdwg.mxu0
    %1317 = vmatprep.subr.bf16.mxu0 %v955
    %1318 = vmatpush1.bf16.msra.mxu0 %v954
    %1319 = vmatprep.subr.bf16.mxu0 %v959
    %1320 = vmatpush1.bf16.msra.mxu0 %v958
    %1321 = vmatprep.subr.bf16.mxu0 %v963
    %1322 = vmatpush1.bf16.msra.mxu0 %v962
    %1323 = vmatprep.subr.bf16.mxu0 %v967
    %1324 = vmatpush1.bf16.msra.mxu0 %v966
    %1325 = vmatprep.subr.bf16.mxu0 %v971
    %1326 = vmatpush1.bf16.msra.mxu0 %v970
    %1327 = vmatprep.subr.bf16.mxu0 %v975
    %1328 = vmatpush1.bf16.msra.mxu0 %v974
    %1329 = vmatprep.subr.bf16.mxu0 %v979
    %1330 = vmatpush1.bf16.msra.mxu0 %v978
    %1331 = vmatprep.subr.bf16.mxu0 %v983
    %1332 = vmatpush1.bf16.msra.mxu0 %v982
    %1333 = vmatprep.subr.bf16.mxu0 %v987
    %1334 = vmatpush1.bf16.msra.mxu0 %v986
    %1335 = vmatprep.subr.bf16.mxu0 %v991
    %1336 = vmatpush1.bf16.msra.mxu0 %v990
    %1337 = vmatprep.subr.bf16.mxu0 %v995
    %1338 = vmatpush1.bf16.msra.mxu0 %v994
    %1339 = vmatprep.subr.bf16.mxu0 %v999
    %1340 = vmatpush1.bf16.msra.mxu0 %v998
    %1341 = vmatprep.subr.bf16.mxu0 %v1003
    %1342 = vmatpush1.bf16.msra.mxu0 %v1002
    %1343 = vmatprep.subr.bf16.mxu0 %v1007
    %1344 = vmatpush1.bf16.msra.mxu0 %v1006
    %1345 = vmatprep.subr.bf16.mxu0 %v1011
    %1346 = vmatpush1.bf16.msra.mxu0 %v1010
    %1347 = vmatprep.subr.bf16.mxu0 %v1015
    %1348 = vmatpush1.bf16.msra.mxu0 %v1014
    %1349 = vmatprep.mubr.bf16.mxu0 %v97
    %1350 = vmatmul.mubr.bf16.gmra.mrb[0].mxu0 %v96
    %v1351 = vpop.f32.mrb[0].mxu0
    %v1352 = vadd.f32 %v1309, %v1351
    %v1353 = vpop.f32.mrb[0].mxu0
    %v1354 = vadd.f32 %v1311, %v1353
    %v1355 = vpop.f32.mrb[0].mxu0
    %v1356 = vadd.f32 %v1313, %v1355
    %v1357 = vpop.f32.mrb[0].mxu0
    %v1358 = vadd.f32 %v1315, %v1357
    %1359 = vdwg.mxu0
    %1360 = vmatprep.subr.bf16.mxu0 %v1019
    %1361 = vmatpush1.bf16.msra.mxu0 %v1018
    %1362 = vmatprep.subr.bf16.mxu0 %v1023
    %1363 = vmatpush1.bf16.msra.mxu0 %v1022
    %1364 = vmatprep.subr.bf16.mxu0 %v1027
    %1365 = vmatpush1.bf16.msra.mxu0 %v1026
    %1366 = vmatprep.subr.bf16.mxu0 %v1031
    %1367 = vmatpush1.bf16.msra.mxu0 %v1030
    %1368 = vmatprep.subr.bf16.mxu0 %v1035
    %1369 = vmatpush1.bf16.msra.mxu0 %v1034
    %1370 = vmatprep.subr.bf16.mxu0 %v1039
    %1371 = vmatpush1.bf16.msra.mxu0 %v1038
    %1372 = vmatprep.subr.bf16.mxu0 %v1043
    %1373 = vmatpush1.bf16.msra.mxu0 %v1042
    %1374 = vmatprep.subr.bf16.mxu0 %v1047
    %1375 = vmatpush1.bf16.msra.mxu0 %v1046
    %1376 = vmatprep.subr.bf16.mxu0 %v1051
    %1377 = vmatpush1.bf16.msra.mxu0 %v1050
    %1378 = vmatprep.subr.bf16.mxu0 %v1055
    %1379 = vmatpush1.bf16.msra.mxu0 %v1054
    %1380 = vmatprep.subr.bf16.mxu0 %v1059
    %1381 = vmatpush1.bf16.msra.mxu0 %v1058
    %1382 = vmatprep.subr.bf16.mxu0 %v1063
    %1383 = vmatpush1.bf16.msra.mxu0 %v1062
    %1384 = vmatprep.subr.bf16.mxu0 %v1067
    %1385 = vmatpush1.bf16.msra.mxu0 %v1066
    %1386 = vmatprep.subr.bf16.mxu0 %v1071
    %1387 = vmatpush1.bf16.msra.mxu0 %v1070
    %1388 = vmatprep.subr.bf16.mxu0 %v1075
    %1389 = vmatpush1.bf16.msra.mxu0 %v1074
    %1390 = vmatprep.subr.bf16.mxu0 %v1079
    %1391 = vmatpush1.bf16.msra.mxu0 %v1078
    %1392 = vmatprep.mubr.bf16.mxu0 %v99
    %1393 = vmatmul.mubr.bf16.gmra.mrb[0].mxu0 %v98
    %v1394 = vpop.f32.mrb[0].mxu0
    %v1395 = vadd.f32 %v1352, %v1394
    %v1396 = vpop.f32.mrb[0].mxu0
    %v1397 = vadd.f32 %v1354, %v1396
    %v1398 = vpop.f32.mrb[0].mxu0
    %v1399 = vadd.f32 %v1356, %v1398
    %v1400 = vpop.f32.mrb[0].mxu0
    %v1401 = vadd.f32 %v1358, %v1400
    %1402 = vdwg.mxu0
    %1403 = vmatprep.subr.bf16.mxu0 %v893
    %1404 = vmatpush1.bf16.msra.mxu0 %v892
    %1405 = vmatprep.subr.bf16.mxu0 %v897
    %1406 = vmatpush1.bf16.msra.mxu0 %v896
    %1407 = vmatprep.subr.bf16.mxu0 %v901
    %1408 = vmatpush1.bf16.msra.mxu0 %v900
    %1409 = vmatprep.subr.bf16.mxu0 %v905
    %1410 = vmatpush1.bf16.msra.mxu0 %v904
    %1411 = vmatprep.subr.bf16.mxu0 %v909
    %1412 = vmatpush1.bf16.msra.mxu0 %v908
    %1413 = vmatprep.subr.bf16.mxu0 %v913
    %1414 = vmatpush1.bf16.msra.mxu0 %v912
    %1415 = vmatprep.subr.bf16.mxu0 %v917
    %1416 = vmatpush1.bf16.msra.mxu0 %v916
    %1417 = vmatprep.subr.bf16.mxu0 %v921
    %1418 = vmatpush1.bf16.msra.mxu0 %v920
    %1419 = vmatprep.subr.bf16.mxu0 %v925
    %1420 = vmatpush1.bf16.msra.mxu0 %v924
    %1421 = vmatprep.subr.bf16.mxu0 %v929
    %1422 = vmatpush1.bf16.msra.mxu0 %v928
    %1423 = vmatprep.subr.bf16.mxu0 %v933
    %1424 = vmatpush1.bf16.msra.mxu0 %v932
    %1425 = vmatprep.subr.bf16.mxu0 %v937
    %1426 = vmatpush1.bf16.msra.mxu0 %v936
    %1427 = vmatprep.subr.bf16.mxu0 %v941
    %1428 = vmatpush1.bf16.msra.mxu0 %v940
    %1429 = vmatprep.subr.bf16.mxu0 %v945
    %1430 = vmatpush1.bf16.msra.mxu0 %v944
    %1431 = vmatprep.subr.bf16.mxu0 %v949
    %1432 = vmatpush1.bf16.msra.mxu0 %v948
    %1433 = vmatprep.subr.bf16.mxu0 %v953
    %1434 = vmatpush1.bf16.msra.mxu0 %v952
    %1435 = vmatprep.mubr.bf16.mxu0 %v95
    %1436 = vmatmul.mubr.bf16.gmra.mrb[0].mxu0 %v94
    %v1437 = vpop.f32.mrb[0].mxu0
    %v1438 = vadd.f32 %v305, %v1437
    %v1439 = vpop.f32.mrb[0].mxu0
    %v1440 = vadd.f32 %v309, %v1439
    %v1441 = vpop.f32.mrb[0].mxu0
    %v1442 = vadd.f32 %v305, %v1441
    %v1443 = vpop.f32.mrb[0].mxu0
    %v1444 = vadd.f32 %v309, %v1443
    %1445 = vdwg.mxu0
    %1446 = vmatprep.subr.bf16.mxu0 %v957
    %1447 = vmatpush1.bf16.msra.mxu0 %v956
    %1448 = vmatprep.subr.bf16.mxu0 %v961
    %1449 = vmatpush1.bf16.msra.mxu0 %v960
    %1450 = vmatprep.subr.bf16.mxu0 %v965
    %1451 = vmatpush1.bf16.msra.mxu0 %v964
    %1452 = vmatprep.subr.bf16.mxu0 %v969
    %1453 = vmatpush1.bf16.msra.mxu0 %v968
    %1454 = vmatprep.subr.bf16.mxu0 %v973
    %1455 = vmatpush1.bf16.msra.mxu0 %v972
    %1456 = vmatprep.subr.bf16.mxu0 %v977
    %1457 = vmatpush1.bf16.msra.mxu0 %v976
    %1458 = vmatprep.subr.bf16.mxu0 %v981
    %1459 = vmatpush1.bf16.msra.mxu0 %v980
    %1460 = vmatprep.subr.bf16.mxu0 %v985
    %1461 = vmatpush1.bf16.msra.mxu0 %v984
    %1462 = vmatprep.subr.bf16.mxu0 %v989
    %1463 = vmatpush1.bf16.msra.mxu0 %v988
    %1464 = vmatprep.subr.bf16.mxu0 %v993
    %1465 = vmatpush1.bf16.msra.mxu0 %v992
    %1466 = vmatprep.subr.bf16.mxu0 %v997
    %1467 = vmatpush1.bf16.msra.mxu0 %v996
    %1468 = vmatprep.subr.bf16.mxu0 %v1001
    %1469 = vmatpush1.bf16.msra.mxu0 %v1000
    %1470 = vmatprep.subr.bf16.mxu0 %v1005
    %1471 = vmatpush1.bf16.msra.mxu0 %v1004
    %1472 = vmatprep.subr.bf16.mxu0 %v1009
    %1473 = vmatpush1.bf16.msra.mxu0 %v1008
    %1474 = vmatprep.subr.bf16.mxu0 %v1013
    %1475 = vmatpush1.bf16.msra.mxu0 %v1012
    %1476 = vmatprep.subr.bf16.mxu0 %v1017
    %1477 = vmatpush1.bf16.msra.mxu0 %v1016
    %1478 = vmatprep.mubr.bf16.mxu0 %v97
    %1479 = vmatmul.mubr.bf16.gmra.mrb[0].mxu0 %v96
    %v1480 = vpop.f32.mrb[0].mxu0
    %v1481 = vadd.f32 %v1438, %v1480
    %v1482 = vpop.f32.mrb[0].mxu0
    %v1483 = vadd.f32 %v1440, %v1482
    %v1484 = vpop.f32.mrb[0].mxu0
    %v1485 = vadd.f32 %v1442, %v1484
    %v1486 = vpop.f32.mrb[0].mxu0
    %v1487 = vadd.f32 %v1444, %v1486
    %1488 = vdwg.mxu0
    %1489 = vmatprep.subr.bf16.mxu0 %v1021
    %1490 = vmatpush1.bf16.msra.mxu0 %v1020
    %1491 = vmatprep.subr.bf16.mxu0 %v1025
    %1492 = vmatpush1.bf16.msra.mxu0 %v1024
    %1493 = vmatprep.subr.bf16.mxu0 %v1029
    %1494 = vmatpush1.bf16.msra.mxu0 %v1028
    %1495 = vmatprep.subr.bf16.mxu0 %v1033
    %1496 = vmatpush1.bf16.msra.mxu0 %v1032
    %1497 = vmatprep.subr.bf16.mxu0 %v1037
    %1498 = vmatpush1.bf16.msra.mxu0 %v1036
    %1499 = vmatprep.subr.bf16.mxu0 %v1041
    %1500 = vmatpush1.bf16.msra.mxu0 %v1040
    %1501 = vmatprep.subr.bf16.mxu0 %v1045
    %1502 = vmatpush1.bf16.msra.mxu0 %v1044
    %1503 = vmatprep.subr.bf16.mxu0 %v1049
    %1504 = vmatpush1.bf16.msra.mxu0 %v1048
    %1505 = vmatprep.subr.bf16.mxu0 %v1053
    %1506 = vmatpush1.bf16.msra.mxu0 %v1052
    %1507 = vmatprep.subr.bf16.mxu0 %v1057
    %1508 = vmatpush1.bf16.msra.mxu0 %v1056
    %1509 = vmatprep.subr.bf16.mxu0 %v1061
    %1510 = vmatpush1.bf16.msra.mxu0 %v1060
    %1511 = vmatprep.subr.bf16.mxu0 %v1065
    %1512 = vmatpush1.bf16.msra.mxu0 %v1064
    %1513 = vmatprep.subr.bf16.mxu0 %v1069
    %1514 = vmatpush1.bf16.msra.mxu0 %v1068
    %1515 = vmatprep.subr.bf16.mxu0 %v1073
    %1516 = vmatpush1.bf16.msra.mxu0 %v1072
    %1517 = vmatprep.subr.bf16.mxu0 %v1077
    %1518 = vmatpush1.bf16.msra.mxu0 %v1076
    %1519 = vmatprep.subr.bf16.mxu0 %v1081
    %1520 = vmatpush1.bf16.msra.mxu0 %v1080
    %1521 = vmatprep.mubr.bf16.mxu0 %v99
    %1522 = vmatmul.mubr.bf16.gmra.mrb[0].mxu0 %v98
    %v1523 = vpop.f32.mrb[0].mxu0
    %v1524 = vadd.f32 %v1481, %v1523
    %v1525 = vpop.f32.mrb[0].mxu0
    %v1526 = vadd.f32 %v1483, %v1525
    %v1527 = vpop.f32.mrb[0].mxu0
    %v1528 = vadd.f32 %v1485, %v1527
    %v1529 = vpop.f32.mrb[0].mxu0
    %v1530 = vadd.f32 %v1487, %v1529
    %1531 = vdwg.mxu0
    %v1532 = vmax.f32 %v1395, 0.0
    %v1533 = vmax.f32 %v1397, 0.0
    %v1534 = vmax.f32 %v1524, 0.0
    %v1535 = vmax.f32 %v1526, 0.0
    %v1536 = vmax.f32 %v1399, 0.0
    %v1537 = vmax.f32 %v1401, 0.0
    %v1538 = vmax.f32 %v1528, 0.0
    %v1539 = vmax.f32 %v1530, 0.0
    %v1540 = vpack.c.bf16 %v1536, %v1532
    %v1541 = vpack.c.bf16 %v1537, %v1533
    %v1542 = vpack.c.bf16 %v1538, %v1534
    %v1543 = vpack.c.bf16 %v1539, %v1535
    %v1544 = vld [vmem:[#allocation7] sm:$0xff]
    %v1545 = vld [vmem:[#allocation7 + $0x8] sm:$0xff]
    %v1546 = vld [vmem:[#allocation7 + $0x10] sm:$0xff]
    %v1547 = vld [vmem:[#allocation7 + $0x18] sm:$0xff]
    %v1548 = vld [vmem:[#allocation7 + $0x20] sm:$0xff]
    %v1549 = vld [vmem:[#allocation7 + $0x28] sm:$0xff]
    %v1550 = vld [vmem:[#allocation7 + $0x30] sm:$0xff]
    %v1551 = vld [vmem:[#allocation7 + $0x38] sm:$0xff]
    %v1552 = vld [vmem:[#allocation7 + $0x40] sm:$0xff]
    %v1553 = vld [vmem:[#allocation7 + $0x48] sm:$0xff]
    %v1554 = vld [vmem:[#allocation7 + $0x50] sm:$0xff]
    %v1555 = vld [vmem:[#allocation7 + $0x58] sm:$0xff]
    %v1556 = vld [vmem:[#allocation7 + $0x60] sm:$0xff]
    %v1557 = vld [vmem:[#allocation7 + $0x68] sm:$0xff]
    %v1558 = vld [vmem:[#allocation7 + $0x70] sm:$0xff]
    %v1559 = vld [vmem:[#allocation7 + $0x78] sm:$0xff]
    %v1560 = vld [vmem:[#allocation7 + $0x80] sm:$0xff]
    %v1561 = vld [vmem:[#allocation7 + $0x88] sm:$0xff]
    %v1562 = vld [vmem:[#allocation7 + $0x90] sm:$0xff]
    %v1563 = vld [vmem:[#allocation7 + $0x98] sm:$0xff]
    %v1564 = vld [vmem:[#allocation7 + $0xa0] sm:$0xff]
    %v1565 = vld [vmem:[#allocation7 + $0xa8] sm:$0xff]
    %v1566 = vld [vmem:[#allocation7 + $0xb0] sm:$0xff]
    %v1567 = vld [vmem:[#allocation7 + $0xb8] sm:$0xff]
    %v1568 = vld [vmem:[#allocation7 + $0xc0] sm:$0xff]
    %v1569 = vld [vmem:[#allocation7 + $0xc8] sm:$0xff]
    %v1570 = vld [vmem:[#allocation7 + $0xd0] sm:$0xff]
    %v1571 = vld [vmem:[#allocation7 + $0xd8] sm:$0xff]
    %v1572 = vld [vmem:[#allocation7 + $0xe0] sm:$0xff]
    %v1573 = vld [vmem:[#allocation7 + $0xe8] sm:$0xff]
    %v1574 = vld [vmem:[#allocation7 + $0xf0] sm:$0xff]
    %v1575 = vld [vmem:[#allocation7 + $0xf8] sm:$0xff]
    %v1576 = vld [vmem:[#allocation7 + $0x100] sm:$0xff]
    %v1577 = vld [vmem:[#allocation7 + $0x108] sm:$0xff]
    %v1578 = vld [vmem:[#allocation7 + $0x110] sm:$0xff]
    %v1579 = vld [vmem:[#allocation7 + $0x118] sm:$0xff]
    %v1580 = vld [vmem:[#allocation7 + $0x120] sm:$0xff]
    %v1581 = vld [vmem:[#allocation7 + $0x128] sm:$0xff]
    %v1582 = vld [vmem:[#allocation7 + $0x130] sm:$0xff]
    %v1583 = vld [vmem:[#allocation7 + $0x138] sm:$0xff]
    %v1584 = vld [vmem:[#allocation7 + $0x140] sm:$0xff]
    %v1585 = vld [vmem:[#allocation7 + $0x148] sm:$0xff]
    %v1586 = vld [vmem:[#allocation7 + $0x150] sm:$0xff]
    %v1587 = vld [vmem:[#allocation7 + $0x158] sm:$0xff]
    %v1588 = vld [vmem:[#allocation7 + $0x160] sm:$0xff]
    %v1589 = vld [vmem:[#allocation7 + $0x168] sm:$0xff]
    %v1590 = vld [vmem:[#allocation7 + $0x170] sm:$0xff]
    %v1591 = vld [vmem:[#allocation7 + $0x178] sm:$0xff]
    %v1592 = vld [vmem:[#allocation7 + $0x180] sm:$0xff]
    %v1593 = vld [vmem:[#allocation7 + $0x188] sm:$0xff]
    %v1594 = vld [vmem:[#allocation7 + $0x190] sm:$0xff]
    %v1595 = vld [vmem:[#allocation7 + $0x198] sm:$0xff]
    %v1596 = vld [vmem:[#allocation7 + $0x1a0] sm:$0xff]
    %v1597 = vld [vmem:[#allocation7 + $0x1a8] sm:$0xff]
    %v1598 = vld [vmem:[#allocation7 + $0x1b0] sm:$0xff]
    %v1599 = vld [vmem:[#allocation7 + $0x1b8] sm:$0xff]
    %v1600 = vld [vmem:[#allocation7 + $0x1c0] sm:$0xff]
    %v1601 = vld [vmem:[#allocation7 + $0x1c8] sm:$0xff]
    %v1602 = vld [vmem:[#allocation7 + $0x1d0] sm:$0xff]
    %v1603 = vld [vmem:[#allocation7 + $0x1d8] sm:$0xff]
    %v1604 = vld [vmem:[#allocation7 + $0x1e0] sm:$0xff]
    %v1605 = vld [vmem:[#allocation7 + $0x1e8] sm:$0xff]
    %v1606 = vld [vmem:[#allocation7 + $0x1f0] sm:$0xff]
    %v1607 = vld [vmem:[#allocation7 + $0x1f8] sm:$0xff]
    %v1608 = vld [vmem:[%s4] sm:$0x3]
    %v1610 = vlaneseq
    %v1611 = vshrl.u32 %v1610, 7
    %v1612 = vsub.s32 0, %v1611
    %v1613 = vrot.slane %v1608, %v1612
    %v1614 = vlaneseq
    %v1615 = vshrl.u32 %v1614, 7
    %v1616 = vsub.s32 1, %v1615
    %v1617 = vrot.slane %v1608, %v1616
    %v1684 = vunpack.c.l.b16 %v1544
    %v1685 = vunpack.c.h.b16 %v1544
    %v1686 = vunpack.c.l.b16 %v1545
    %v1687 = vunpack.c.h.b16 %v1545
    %v1688 = vunpack.c.l.b16 %v1546
    %v1689 = vunpack.c.h.b16 %v1546
    %v1690 = vunpack.c.l.b16 %v1547
    %v1691 = vunpack.c.h.b16 %v1547
    %v1692 = vunpack.c.l.b16 %v1548
    %v1693 = vunpack.c.h.b16 %v1548
    %v1694 = vunpack.c.l.b16 %v1549
    %v1695 = vunpack.c.h.b16 %v1549
    %v1696 = vunpack.c.l.b16 %v1550
    %v1697 = vunpack.c.h.b16 %v1550
    %v1698 = vunpack.c.l.b16 %v1551
    %v1699 = vunpack.c.h.b16 %v1551
    %v1700 = vunpack.c.l.b16 %v1552
    %v1701 = vunpack.c.h.b16 %v1552
    %v1702 = vunpack.c.l.b16 %v1553
    %v1703 = vunpack.c.h.b16 %v1553
    %v1704 = vunpack.c.l.b16 %v1554
    %v1705 = vunpack.c.h.b16 %v1554
    %v1706 = vunpack.c.l.b16 %v1555
    %v1707 = vunpack.c.h.b16 %v1555
    %v1708 = vunpack.c.l.b16 %v1556
    %v1709 = vunpack.c.h.b16 %v1556
    %v1710 = vunpack.c.l.b16 %v1557
    %v1711 = vunpack.c.h.b16 %v1557
    %v1712 = vunpack.c.l.b16 %v1558
    %v1713 = vunpack.c.h.b16 %v1558
    %v1714 = vunpack.c.l.b16 %v1559
    %v1715 = vunpack.c.h.b16 %v1559
    %v1716 = vunpack.c.l.b16 %v1560
    %v1717 = vunpack.c.h.b16 %v1560
    %v1718 = vunpack.c.l.b16 %v1561
    %v1719 = vunpack.c.h.b16 %v1561
    %v1720 = vunpack.c.l.b16 %v1562
    %v1721 = vunpack.c.h.b16 %v1562
    %v1722 = vunpack.c.l.b16 %v1563
    %v1723 = vunpack.c.h.b16 %v1563
    %v1724 = vunpack.c.l.b16 %v1564
    %v1725 = vunpack.c.h.b16 %v1564
    %v1726 = vunpack.c.l.b16 %v1565
    %v1727 = vunpack.c.h.b16 %v1565
    %v1728 = vunpack.c.l.b16 %v1566
    %v1729 = vunpack.c.h.b16 %v1566
    %v1730 = vunpack.c.l.b16 %v1567
    %v1731 = vunpack.c.h.b16 %v1567
    %v1732 = vunpack.c.l.b16 %v1568
    %v1733 = vunpack.c.h.b16 %v1568
    %v1734 = vunpack.c.l.b16 %v1569
    %v1735 = vunpack.c.h.b16 %v1569
    %v1736 = vunpack.c.l.b16 %v1570
    %v1737 = vunpack.c.h.b16 %v1570
    %v1738 = vunpack.c.l.b16 %v1571
    %v1739 = vunpack.c.h.b16 %v1571
    %v1740 = vunpack.c.l.b16 %v1572
    %v1741 = vunpack.c.h.b16 %v1572
    %v1742 = vunpack.c.l.b16 %v1573
    %v1743 = vunpack.c.h.b16 %v1573
    %v1744 = vunpack.c.l.b16 %v1574
    %v1745 = vunpack.c.h.b16 %v1574
    %v1746 = vunpack.c.l.b16 %v1575
    %v1747 = vunpack.c.h.b16 %v1575
    %v1748 = vunpack.c.l.b16 %v1576
    %v1749 = vunpack.c.h.b16 %v1576
    %v1750 = vunpack.c.l.b16 %v1577
    %v1751 = vunpack.c.h.b16 %v1577
    %v1752 = vunpack.c.l.b16 %v1578
    %v1753 = vunpack.c.h.b16 %v1578
    %v1754 = vunpack.c.l.b16 %v1579
    %v1755 = vunpack.c.h.b16 %v1579
    %v1756 = vunpack.c.l.b16 %v1580
    %v1757 = vunpack.c.h.b16 %v1580
    %v1758 = vunpack.c.l.b16 %v1581
    %v1759 = vunpack.c.h.b16 %v1581
    %v1760 = vunpack.c.l.b16 %v1582
    %v1761 = vunpack.c.h.b16 %v1582
    %v1762 = vunpack.c.l.b16 %v1583
    %v1763 = vunpack.c.h.b16 %v1583
    %v1764 = vunpack.c.l.b16 %v1584
    %v1765 = vunpack.c.h.b16 %v1584
    %v1766 = vunpack.c.l.b16 %v1585
    %v1767 = vunpack.c.h.b16 %v1585
    %v1768 = vunpack.c.l.b16 %v1586
    %v1769 = vunpack.c.h.b16 %v1586
    %v1770 = vunpack.c.l.b16 %v1587
    %v1771 = vunpack.c.h.b16 %v1587
    %v1772 = vunpack.c.l.b16 %v1588
    %v1773 = vunpack.c.h.b16 %v1588
    %v1774 = vunpack.c.l.b16 %v1589
    %v1775 = vunpack.c.h.b16 %v1589
    %v1776 = vunpack.c.l.b16 %v1590
    %v1777 = vunpack.c.h.b16 %v1590
    %v1778 = vunpack.c.l.b16 %v1591
    %v1779 = vunpack.c.h.b16 %v1591
    %v1780 = vunpack.c.l.b16 %v1592
    %v1781 = vunpack.c.h.b16 %v1592
    %v1782 = vunpack.c.l.b16 %v1593
    %v1783 = vunpack.c.h.b16 %v1593
    %v1784 = vunpack.c.l.b16 %v1594
    %v1785 = vunpack.c.h.b16 %v1594
    %v1786 = vunpack.c.l.b16 %v1595
    %v1787 = vunpack.c.h.b16 %v1595
    %v1788 = vunpack.c.l.b16 %v1596
    %v1789 = vunpack.c.h.b16 %v1596
    %v1790 = vunpack.c.l.b16 %v1597
    %v1791 = vunpack.c.h.b16 %v1597
    %v1792 = vunpack.c.l.b16 %v1598
    %v1793 = vunpack.c.h.b16 %v1598
    %v1794 = vunpack.c.l.b16 %v1599
    %v1795 = vunpack.c.h.b16 %v1599
    %v1796 = vunpack.c.l.b16 %v1600
    %v1797 = vunpack.c.h.b16 %v1600
    %v1798 = vunpack.c.l.b16 %v1601
    %v1799 = vunpack.c.h.b16 %v1601
    %v1800 = vunpack.c.l.b16 %v1602
    %v1801 = vunpack.c.h.b16 %v1602
    %v1802 = vunpack.c.l.b16 %v1603
    %v1803 = vunpack.c.h.b16 %v1603
    %v1804 = vunpack.c.l.b16 %v1604
    %v1805 = vunpack.c.h.b16 %v1604
    %v1806 = vunpack.c.l.b16 %v1605
    %v1807 = vunpack.c.h.b16 %v1605
    %v1808 = vunpack.c.l.b16 %v1606
    %v1809 = vunpack.c.h.b16 %v1606
    %v1810 = vunpack.c.l.b16 %v1607
    %v1811 = vunpack.c.h.b16 %v1607
    %v1812 = vpack.c.b16 %v1686, %v1684
    %v1813 = vpack.c.b16 %v1687, %v1685
    %v1814 = vpack.c.b16 %v1690, %v1688
    %v1815 = vpack.c.b16 %v1691, %v1689
    %v1816 = vpack.c.b16 %v1694, %v1692
    %v1817 = vpack.c.b16 %v1695, %v1693
    %v1818 = vpack.c.b16 %v1698, %v1696
    %v1819 = vpack.c.b16 %v1699, %v1697
    %v1820 = vpack.c.b16 %v1702, %v1700
    %v1821 = vpack.c.b16 %v1703, %v1701
    %v1822 = vpack.c.b16 %v1706, %v1704
    %v1823 = vpack.c.b16 %v1707, %v1705
    %v1824 = vpack.c.b16 %v1710, %v1708
    %v1825 = vpack.c.b16 %v1711, %v1709
    %v1826 = vpack.c.b16 %v1714, %v1712
    %v1827 = vpack.c.b16 %v1715, %v1713
    %v1828 = vpack.c.b16 %v1718, %v1716
    %v1829 = vpack.c.b16 %v1719, %v1717
    %v1830 = vpack.c.b16 %v1722, %v1720
    %v1831 = vpack.c.b16 %v1723, %v1721
    %v1832 = vpack.c.b16 %v1726, %v1724
    %v1833 = vpack.c.b16 %v1727, %v1725
    %v1834 = vpack.c.b16 %v1730, %v1728
    %v1835 = vpack.c.b16 %v1731, %v1729
    %v1836 = vpack.c.b16 %v1734, %v1732
    %v1837 = vpack.c.b16 %v1735, %v1733
    %v1838 = vpack.c.b16 %v1738, %v1736
    %v1839 = vpack.c.b16 %v1739, %v1737
    %v1840 = vpack.c.b16 %v1742, %v1740
    %v1841 = vpack.c.b16 %v1743, %v1741
    %v1842 = vpack.c.b16 %v1746, %v1744
    %v1843 = vpack.c.b16 %v1747, %v1745
    %v1844 = vpack.c.b16 %v1750, %v1748
    %v1845 = vpack.c.b16 %v1751, %v1749
    %v1846 = vpack.c.b16 %v1754, %v1752
    %v1847 = vpack.c.b16 %v1755, %v1753
    %v1848 = vpack.c.b16 %v1758, %v1756
    %v1849 = vpack.c.b16 %v1759, %v1757
    %v1850 = vpack.c.b16 %v1762, %v1760
    %v1851 = vpack.c.b16 %v1763, %v1761
    %v1852 = vpack.c.b16 %v1766, %v1764
    %v1853 = vpack.c.b16 %v1767, %v1765
    %v1854 = vpack.c.b16 %v1770, %v1768
    %v1855 = vpack.c.b16 %v1771, %v1769
    %v1856 = vpack.c.b16 %v1774, %v1772
    %v1857 = vpack.c.b16 %v1775, %v1773
    %v1858 = vpack.c.b16 %v1778, %v1776
    %v1859 = vpack.c.b16 %v1779, %v1777
    %v1860 = vpack.c.b16 %v1782, %v1780
    %v1861 = vpack.c.b16 %v1783, %v1781
    %v1862 = vpack.c.b16 %v1786, %v1784
    %v1863 = vpack.c.b16 %v1787, %v1785
    %v1864 = vpack.c.b16 %v1790, %v1788
    %v1865 = vpack.c.b16 %v1791, %v1789
    %v1866 = vpack.c.b16 %v1794, %v1792
    %v1867 = vpack.c.b16 %v1795, %v1793
    %v1868 = vpack.c.b16 %v1798, %v1796
    %v1869 = vpack.c.b16 %v1799, %v1797
    %v1870 = vpack.c.b16 %v1802, %v1800
    %v1871 = vpack.c.b16 %v1803, %v1801
    %v1872 = vpack.c.b16 %v1806, %v1804
    %v1873 = vpack.c.b16 %v1807, %v1805
    %v1874 = vpack.c.b16 %v1810, %v1808
    %v1875 = vpack.c.b16 %v1811, %v1809
    %1940 = vmatprep.subr.bf16.mxu0 %v1813
    %1941 = vmatpush1.bf16.msra.mxu0 %v1812
    %1942 = vmatprep.subr.bf16.mxu0 %v1815
    %1943 = vmatpush1.bf16.msra.mxu0 %v1814
    %1944 = vmatprep.subr.bf16.mxu0 %v1817
    %1945 = vmatpush1.bf16.msra.mxu0 %v1816
    %1946 = vmatprep.subr.bf16.mxu0 %v1819
    %1947 = vmatpush1.bf16.msra.mxu0 %v1818
    %1948 = vmatprep.subr.bf16.mxu0 %v1821
    %1949 = vmatpush1.bf16.msra.mxu0 %v1820
    %1950 = vmatprep.subr.bf16.mxu0 %v1823
    %1951 = vmatpush1.bf16.msra.mxu0 %v1822
    %1952 = vmatprep.subr.bf16.mxu0 %v1825
    %1953 = vmatpush1.bf16.msra.mxu0 %v1824
    %1954 = vmatprep.subr.bf16.mxu0 %v1827
    %1955 = vmatpush1.bf16.msra.mxu0 %v1826
    %1956 = vmatprep.subr.bf16.mxu0 %v1829
    %1957 = vmatpush1.bf16.msra.mxu0 %v1828
    %1958 = vmatprep.subr.bf16.mxu0 %v1831
    %1959 = vmatpush1.bf16.msra.mxu0 %v1830
    %1960 = vmatprep.subr.bf16.mxu0 %v1833
    %1961 = vmatpush1.bf16.msra.mxu0 %v1832
    %1962 = vmatprep.subr.bf16.mxu0 %v1835
    %1963 = vmatpush1.bf16.msra.mxu0 %v1834
    %1964 = vmatprep.subr.bf16.mxu0 %v1837
    %1965 = vmatpush1.bf16.msra.mxu0 %v1836
    %1966 = vmatprep.subr.bf16.mxu0 %v1839
    %1967 = vmatpush1.bf16.msra.mxu0 %v1838
    %1968 = vmatprep.subr.bf16.mxu0 %v1841
    %1969 = vmatpush1.bf16.msra.mxu0 %v1840
    %1970 = vmatprep.subr.bf16.mxu0 %v1843
    %1971 = vmatpush1.bf16.msra.mxu0 %v1842
    %1972 = vmatprep.mubr.bf16.mxu0 %v1541
    %1973 = vmatmul.mubr.bf16.gmra.mrb[0].mxu0 %v1540
    %v1974 = vpop.f32.mrb[0].mxu0
    %v1975 = vadd.f32 %v1613, %v1974
    %v1976 = vpop.f32.mrb[0].mxu0
    %v1977 = vadd.f32 %v1617, %v1976
    %v1978 = vpop.f32.mrb[0].mxu0
    %v1979 = vadd.f32 %v1613, %v1978
    %v1980 = vpop.f32.mrb[0].mxu0
    %v1981 = vadd.f32 %v1617, %v1980
    %1982 = vdwg.mxu0
    %1983 = vmatprep.subr.bf16.mxu0 %v1845
    %1984 = vmatpush1.bf16.msra.mxu0 %v1844
    %1985 = vmatprep.subr.bf16.mxu0 %v1847
    %1986 = vmatpush1.bf16.msra.mxu0 %v1846
    %1987 = vmatprep.subr.bf16.mxu0 %v1849
    %1988 = vmatpush1.bf16.msra.mxu0 %v1848
    %1989 = vmatprep.subr.bf16.mxu0 %v1851
    %1990 = vmatpush1.bf16.msra.mxu0 %v1850
    %1991 = vmatprep.subr.bf16.mxu0 %v1853
    %1992 = vmatpush1.bf16.msra.mxu0 %v1852
    %1993 = vmatprep.subr.bf16.mxu0 %v1855
    %1994 = vmatpush1.bf16.msra.mxu0 %v1854
    %1995 = vmatprep.subr.bf16.mxu0 %v1857
    %1996 = vmatpush1.bf16.msra.mxu0 %v1856
    %1997 = vmatprep.subr.bf16.mxu0 %v1859
    %1998 = vmatpush1.bf16.msra.mxu0 %v1858
    %1999 = vmatprep.subr.bf16.mxu0 %v1861
    %2000 = vmatpush1.bf16.msra.mxu0 %v1860
    %2001 = vmatprep.subr.bf16.mxu0 %v1863
    %2002 = vmatpush1.bf16.msra.mxu0 %v1862
    %2003 = vmatprep.subr.bf16.mxu0 %v1865
    %2004 = vmatpush1.bf16.msra.mxu0 %v1864
    %2005 = vmatprep.subr.bf16.mxu0 %v1867
    %2006 = vmatpush1.bf16.msra.mxu0 %v1866
    %2007 = vmatprep.subr.bf16.mxu0 %v1869
    %2008 = vmatpush1.bf16.msra.mxu0 %v1868
    %2009 = vmatprep.subr.bf16.mxu0 %v1871
    %2010 = vmatpush1.bf16.msra.mxu0 %v1870
    %2011 = vmatprep.subr.bf16.mxu0 %v1873
    %2012 = vmatpush1.bf16.msra.mxu0 %v1872
    %2013 = vmatprep.subr.bf16.mxu0 %v1875
    %2014 = vmatpush1.bf16.msra.mxu0 %v1874
    %2015 = vmatprep.mubr.bf16.mxu0 %v1543
    %2016 = vmatmul.mubr.bf16.gmra.mrb[0].mxu0 %v1542
    %v2017 = vpop.f32.mrb[0].mxu0
    %v2018 = vadd.f32 %v1975, %v2017
    %v2019 = vpop.f32.mrb[0].mxu0
    %v2020 = vadd.f32 %v1977, %v2019
    %v2021 = vpop.f32.mrb[0].mxu0
    %v2022 = vadd.f32 %v1979, %v2021
    %v2023 = vpop.f32.mrb[0].mxu0
    %v2024 = vadd.f32 %v1981, %v2023
    %2025 = vdwg.mxu0
    %v2026 = vmax.f32 %v2018, 0.0
    %v2027 = vmax.f32 %v2020, 0.0
    %v2028 = vmax.f32 %v2022, 0.0
    %v2029 = vmax.f32 %v2024, 0.0
    %v2030 = vld [vmem:[#allocation8] sm:$0xff]
    %v2031 = vld [vmem:[#allocation8 + $0x8] sm:$0xff]
    %v2032 = vld [vmem:[#allocation8 + $0x10] sm:$0xff]
    %v2033 = vld [vmem:[#allocation8 + $0x18] sm:$0xff]
    %v2034 = vld [vmem:[#allocation8 + $0x20] sm:$0xff]
    %v2035 = vld [vmem:[#allocation8 + $0x28] sm:$0xff]
    %v2036 = vld [vmem:[#allocation8 + $0x30] sm:$0xff]
    %v2037 = vld [vmem:[#allocation8 + $0x38] sm:$0xff]
    %v2038 = vld [vmem:[#allocation8 + $0x40] sm:$0xff]
    %v2039 = vld [vmem:[#allocation8 + $0x48] sm:$0xff]
    %v2040 = vld [vmem:[#allocation8 + $0x50] sm:$0xff]
    %v2041 = vld [vmem:[#allocation8 + $0x58] sm:$0xff]
    %v2042 = vld [vmem:[#allocation8 + $0x60] sm:$0xff]
    %v2043 = vld [vmem:[#allocation8 + $0x68] sm:$0xff]
    %v2044 = vld [vmem:[#allocation8 + $0x70] sm:$0xff]
    %v2045 = vld [vmem:[#allocation8 + $0x78] sm:$0xff]
    %v2046 = vld [vmem:[#allocation8 + $0x80] sm:$0xff]
    %v2047 = vld [vmem:[#allocation8 + $0x88] sm:$0xff]
    %v2048 = vld [vmem:[#allocation8 + $0x90] sm:$0xff]
    %v2049 = vld [vmem:[#allocation8 + $0x98] sm:$0xff]
    %v2050 = vld [vmem:[#allocation8 + $0xa0] sm:$0xff]
    %v2051 = vld [vmem:[#allocation8 + $0xa8] sm:$0xff]
    %v2052 = vld [vmem:[#allocation8 + $0xb0] sm:$0xff]
    %v2053 = vld [vmem:[#allocation8 + $0xb8] sm:$0xff]
    %v2054 = vld [vmem:[#allocation8 + $0xc0] sm:$0xff]
    %v2055 = vld [vmem:[#allocation8 + $0xc8] sm:$0xff]
    %v2056 = vld [vmem:[#allocation8 + $0xd0] sm:$0xff]
    %v2057 = vld [vmem:[#allocation8 + $0xd8] sm:$0xff]
    %v2058 = vld [vmem:[#allocation8 + $0xe0] sm:$0xff]
    %v2059 = vld [vmem:[#allocation8 + $0xe8] sm:$0xff]
    %v2060 = vld [vmem:[#allocation8 + $0xf0] sm:$0xff]
    %v2061 = vld [vmem:[#allocation8 + $0xf8] sm:$0xff]
    %v2062 = vld [vmem:[%s6] sm:$0x1]
    %v2064 = vlaneseq
    %v2065 = vshrl.u32 %v2064, 7
    %v2066 = vsub.s32 0, %v2065
    %v2067 = vrot.slane %v2062, %v2066
    %2069 = vmatprep.subr.mxu0 0.0
    %2070 = vmatpush1.msra.mxu0 %v2030
    %2071 = vmatprep.subr.mxu0 0.0
    %2072 = vmatpush1.msra.mxu0 %v2031
    %2073 = vmatprep.subr.mxu0 0.0
    %2074 = vmatpush1.msra.mxu0 %v2032
    %2075 = vmatprep.subr.mxu0 0.0
    %2076 = vmatpush1.msra.mxu0 %v2033
    %2077 = vmatprep.subr.mxu0 0.0
    %2078 = vmatpush1.msra.mxu0 %v2034
    %2079 = vmatprep.subr.mxu0 0.0
    %2080 = vmatpush1.msra.mxu0 %v2035
    %2081 = vmatprep.subr.mxu0 0.0
    %2082 = vmatpush1.msra.mxu0 %v2036
    %2083 = vmatprep.subr.mxu0 0.0
    %2084 = vmatpush1.msra.mxu0 %v2037
    %2085 = vmatprep.subr.mxu0 0.0
    %2086 = vmatpush1.msra.mxu0 %v2038
    %2087 = vmatprep.subr.mxu0 0.0
    %2088 = vmatpush1.msra.mxu0 %v2039
    %2089 = vmatprep.subr.mxu0 0.0
    %2090 = vmatpush1.msra.mxu0 %v2040
    %2091 = vmatprep.subr.mxu0 0.0
    %2092 = vmatpush1.msra.mxu0 %v2041
    %2093 = vmatprep.subr.mxu0 0.0
    %2094 = vmatpush1.msra.mxu0 %v2042
    %2095 = vmatprep.subr.mxu0 0.0
    %2096 = vmatpush1.msra.mxu0 %v2043
    %2097 = vmatprep.subr.mxu0 0.0
    %2098 = vmatpush1.msra.mxu0 %v2044
    %2099 = vmatprep.subr.mxu0 0.0
    %2100 = vmatpush1.msra.mxu0 %v2045
    %2101 = vmatprep.subr.mxu0 0.0
    %2102 = vmatpush1.msra.mxu0 %v2046
    %2103 = vmatprep.subr.mxu0 0.0
    %2104 = vmatpush1.msra.mxu0 %v2047
    %2105 = vmatprep.subr.mxu0 0.0
    %2106 = vmatpush1.msra.mxu0 %v2048
    %2107 = vmatprep.subr.mxu0 0.0
    %2108 = vmatpush1.msra.mxu0 %v2049
    %2109 = vmatprep.subr.mxu0 0.0
    %2110 = vmatpush1.msra.mxu0 %v2050
    %2111 = vmatprep.subr.mxu0 0.0
    %2112 = vmatpush1.msra.mxu0 %v2051
    %2113 = vmatprep.subr.mxu0 0.0
    %2114 = vmatpush1.msra.mxu0 %v2052
    %2115 = vmatprep.subr.mxu0 0.0
    %2116 = vmatpush1.msra.mxu0 %v2053
    %2117 = vmatprep.subr.mxu0 0.0
    %2118 = vmatpush1.msra.mxu0 %v2054
    %2119 = vmatprep.subr.mxu0 0.0
    %2120 = vmatpush1.msra.mxu0 %v2055
    %2121 = vmatprep.subr.mxu0 0.0
    %2122 = vmatpush1.msra.mxu0 %v2056
    %2123 = vmatprep.subr.mxu0 0.0
    %2124 = vmatpush1.msra.mxu0 %v2057
    %2125 = vmatprep.subr.mxu0 0.0
    %2126 = vmatpush1.msra.mxu0 %v2058
    %2127 = vmatprep.subr.mxu0 0.0
    %2128 = vmatpush1.msra.mxu0 %v2059
    %2129 = vmatprep.subr.mxu0 0.0
    %2130 = vmatpush1.msra.mxu0 %v2060
    %2131 = vmatprep.subr.mxu0 0.0
    %2132 = vmatpush1.msra.mxu0 %v2061
    %2133 = vmatprep.mubr.f32.mxu0 %v2027
    %2134 = vmatmul.mubr.f32.gmra.mrb[0].mxu0 %v2026
    %v2135 = vpop.f32.mrb[0].mxu0
    %v2136 = vadd.f32 %v2067, %v2135
    %v2137 = vpop.f32.mrb[0].mxu0
    %2138 = vmatprep.mubr.f32.mxu0 %v2029
    %2139 = vmatmul.mubr.f32.gmra.mrb[0].mxu0 %v2028
    %v2140 = vpop.f32.mrb[0].mxu0
    %v2141 = vadd.f32 %v2067, %v2140
    %v2142 = vpop.f32.mrb[0].mxu0
    %2143 = vdwg.mxu0
    %v2144 = vmax.f32 %v2136, 0.0
    %v2145 = vmax.f32 %v2141, 0.0
    %v2146 = vand.u32 2147483647, %v2136
    %v2147 = vand.u32 2147483647, %v2141
    %v2148 = vsub.f32 0.0, %v2146
    %v2149 = vsub.f32 0.0, %v2147
    %v2150 = vmul.f32 %v2148, 1.442695
    %v2151 = vpow.pop %v2150
    %v2152 = vmul.f32 %v2149, 1.442695
    %v2153 = vpow.pop %v2152
    %v2154 = vadd.f32 %v2151, 1.0
    %v2155 = vadd.f32 %v2153, 1.0
    %v2156 = vlog2.pop %v2154
    %v2157 = vmul.f32 %v2156, 0.6931472
    %v2158 = vlog2.pop %v2155
    %v2159 = vmul.f32 %v2158, 0.6931472
    %v2160 = vadd.f32 %v2144, %v2157
    %v2161 = vadd.f32 %v2145, %v2159
    %v2162 = vlaneseq
    %v2163 = vand.u32 %v2162, 127
    %vm2164 = vcmp.eq.s32.totalorder %v2163, 0
    %v2165 = vsub.f32 0.0, %v2160
    %v2166 = vsub.f32 0.0, %v2161
    %vm2167 = vcmp.eq.s32.totalorder %v2163, 1
    %v2168 = vsub.f32 %v2136, %v2160
    %v2169 = vsub.f32 %v2141, %v2161
    %v2170 = vsel %vm2167, %v2168, 0.0
    %v2171 = vsel %vm2167, %v2169, 0.0
    %v2172 = vsel %vm2164, %v2165, %v2170
    %v2173 = vsel %vm2164, %v2166, %v2171
    %2174 = vst [vmem:[#allocation10] sm:$0xff] %v2172
    %2175 = vst [vmem:[#allocation10 + $0x8] sm:$0xff] %v2173
    // Predicated region
    $region46: #{tpu_custom_call.1} parent=1 // pred_check
      _
    $region47: #{tpu_custom_call.1} parent=1 // pred_check_branch
      %2177 = sbr.rel (0) target = $region49
    $region48: #{tpu_custom_call.1} parent=1 // pred_region
      %s2179 = ssub.s32 256, 256
      %2180 = vsyncadd [#allocation4], %s2179
      %s2181 = sshll.u32 [#allocation10], 4
      %s2182 = int_to_ptr.vmem [resolvable:$true] %s2181
      %2187 = dma.vmem_to_hbm [thread:$0]  %s2182, 256, %s7, [#allocation4], 128, 128, 8
    $region49: #{tpu_custom_call.1} parent=1 // pred_fallthru
      _
    // Predicated region
    $region50: #{tpu_custom_call.1} parent=1 // pred_check
      _
    $region51: #{tpu_custom_call.1} parent=1 // pred_check_branch
      %2189 = sbr.rel (0) target = $region53
    $region52: #{tpu_custom_call.1} parent=1 // pred_region
      %2190 = dma.done [#allocation4], 256
    $region53: #{tpu_custom_call.1} parent=1 // pred_fallthru
      _
    %2191 = vsyncpa [#allocation3], 1
    %2192 = vsyncpa [#allocation6], 1
    %2193 = vsyncpa [#allocation9], 1
    %2194 = vsyncpa [#allocation4], 1

</llo_original>
